<compile_context>
chip_gen: v7x
topology: tpu7x:2x2x1
jax: 0.10.0
libtpu: 0.0.40
codegen_flags: <defaults>
</compile_context>

<pallas_src>
import jax
import jax.numpy as jnp
from jax.experimental import pallas as pl
from jax.experimental.pallas import tpu as pltpu

OUT_PAD = 128  # lane-dense classifier output width (real logits are columns [:2])


def simple_gnn_kernel(a_ref, x_ref, mt_ref,
                      w1_ref, b1_ref, w2_ref, b2_ref,
                      wg1_ref, bg1_ref, wg2t_ref,
                      wc1_ref, bc1_ref, wc2_ref, bc2_ref,
                      out_ref):
    f32, bf16 = jnp.float32, jnp.bfloat16

    a = a_ref[...]                       # [TBN, TBN] bf16 block-diag normalized adjacency
    x = x_ref[...]                       # [TBN, F]   bf16 node features (TB batches stacked)
    mt_b = mt_ref[...]                   # [TBN, TBG] bf16 block-diag one-hot membership
    mt = mt_b.astype(f32)

    # --- GCNConv 1: (A_hat @ X) @ W1 + b1, ReLU.  bf16 MXU operands, f32 accumulation.
    ax = jnp.dot(a, x, preferred_element_type=f32)                               # [TBN, F]
    h = jnp.dot(ax.astype(bf16), w1_ref[...], preferred_element_type=f32) + b1_ref[...]
    h = jnp.maximum(h, 0.0)                                                       # [TBN, H]
    # dropout_conv1: identity at inference

    # --- GCNConv 2: A_hat @ (H @ W2) + b2, ReLU.
    hw = jnp.dot(h.astype(bf16), w2_ref[...], preferred_element_type=f32)         # [TBN, H]
    h2 = jnp.dot(a, hw.astype(bf16), preferred_element_type=f32) + b2_ref[...]
    h2 = jnp.maximum(h2, 0.0)                                                      # [TBN, H]
    # dropout_conv2: identity at inference

    # --- GlobalAttention gate: Linear(H,128) -> ReLU -> Linear(128,1)
    g = jnp.maximum(
        jnp.dot(h2.astype(bf16), wg1_ref[...], preferred_element_type=f32) + bg1_ref[...],
        0.0)                                                                       # [TBN,128]
    # second gate layer as VPU multiply + lane reduce (no 1-lane-wide MXU result).
    # bg2 is omitted: the per-graph softmax is invariant to a constant gate shift.
    s = jnp.sum(g * wg2t_ref[...], axis=-1, keepdims=True)                         # [TBN, 1]

    # per-graph softmax (shifted by per-graph max), all on VPU/XLU + EUP reciprocal
    big_neg = jnp.float32(-1e30)
    masked = jnp.where(mt > 0.0, jnp.broadcast_to(s, mt.shape), big_neg)           # [TBN,TBG]
    gmax = jnp.max(masked, axis=0, keepdims=True)                                  # [1, TBG]
    shift = jnp.sum(mt * gmax, axis=1, keepdims=True)                              # [TBN, 1]
    e = jnp.exp(s - shift)                                                         # [TBN, 1]
    denom = jnp.sum(mt * e, axis=0, keepdims=True)                                 # [1, TBG]
    inv = pl.reciprocal(denom, approx=False)                                       # [1, TBG]
    w_node = e * jnp.sum(mt * inv, axis=1, keepdims=True)                          # [TBN, 1]

    # pooled[g] = sum_n softmax_w[n] * h2[n]  (contract node dim of block-diag M^T)
    pooled = jnp.einsum('ng,nh->gh', mt_b, (w_node * h2).astype(bf16),
                        preferred_element_type=f32)                                # [TBG, H]

    # --- Classifier: Linear(H,128) -> ReLU -> (Dropout id) -> Linear(128, 2 padded to 128)
    c = jnp.maximum(
        jnp.dot(pooled.astype(bf16), wc1_ref[...], preferred_element_type=f32) + bc1_ref[...],
        0.0)                                                                       # [TBG,128]
    out_ref[...] = jnp.dot(c.astype(bf16), wc2_ref[...],
                           preferred_element_type=f32) + bc2_ref[...]              # [TBG,128]


def _block_diag(blocks, tb):
    """[B, N, M] -> [B//tb, tb*N, tb*M]: block-diagonal merge of groups of tb batches."""
    B, N, M = blocks.shape
    s = B // tb
    eye = jnp.eye(tb, dtype=blocks.dtype)
    out = jnp.einsum('stnm,tu->stnum', blocks.reshape(s, tb, N, M), eye)
    return out.reshape(s, tb * N, tb * M)


def simple_gnn_forward(x, a_hat, mt, params, tb=None):
    """x: [B,N,F] f32, a_hat: [B,N,N] f32, mt: [B,N,G] f32 one-hot (node -> graph).
    Returns logits [B, G, 2] f32."""
    B, N, F = x.shape
    G = mt.shape[-1]
    H = params['w1'].shape[1]
    f32, bf16 = jnp.float32, jnp.bfloat16

    if tb is None:
        tb = B // 2 if B >= 2 else 1      # keep >= 2 grid steps so v7x can use both TCs
    assert B % tb == 0, (B, tb)
    S = B // tb
    TBN, TBG = tb * N, tb * G
    # VMEM note: the per-step block-diag A_hat is O((tb*N)^2) bf16 and double-buffered.
    # TODO(synk): add an N-tiling grid axis (or a scalar-prefetched sparse gather /
    # segment-sum aggregation) before scaling to large graphs, esp. v7x's 64 MiB VMEM.

    # merge tb graph-batches per grid step: block-diagonal A_hat / membership, flat X
    a_bd = _block_diag(a_hat, tb).astype(bf16)        # [S, TBN, TBN]
    mt_bd = _block_diag(mt, tb).astype(bf16)          # [S, TBN, TBG] (0/1 exact in bf16)
    x_fl = x.reshape(S, TBN, F).astype(bf16)          # [S, TBN, F]

    # bf16 weights for every MXU matmul (biases stay f32, added after f32 accumulation)
    w1_b = params['w1'].astype(bf16)
    w2_b = params['w2'].astype(bf16)
    wg1_b = params['wg1'].astype(bf16)
    wc1_b = params['wc1'].astype(bf16)
    wg2t = params['wg2'].reshape(1, -1).astype(f32)   # [1,128] row for the VPU lane-reduce
    wc2p = jnp.zeros((params['wc2'].shape[0], OUT_PAD), f32).at[:, :2].set(
        params['wc2']).astype(bf16)                   # lane-dense padded final linear
    bc2p = jnp.zeros((1, OUT_PAD), f32).at[:, :2].set(params['bc2'])

    ins = [a_bd, x_fl, mt_bd,
           w1_b, params['b1'], w2_b, params['b2'],
           wg1_b, params['bg1'], wg2t,
           wc1_b, params['bc1'], wc2p, bc2p]

    per_step = lambda s: (s, 0, 0)      # this step's TB-batch block
    resident = lambda s: (0, 0)         # weights: same block every step -> stay in VMEM

    in_specs = [
        pl.BlockSpec((None, TBN, TBN), per_step),     # A_hat (block-diag, bf16)
        pl.BlockSpec((None, TBN, F), per_step),       # X (flattened TB batches, bf16)
        pl.BlockSpec((None, TBN, TBG), per_step),     # M^T (block-diag one-hot, bf16)
        pl.BlockSpec(w1_b.shape, resident),           # w1
        pl.BlockSpec(params['b1'].shape, resident),   # b1
        pl.BlockSpec(w2_b.shape, resident),           # w2
        pl.BlockSpec(params['b2'].shape, resident),   # b2
        pl.BlockSpec(wg1_b.shape, resident),          # wg1
        pl.BlockSpec(params['bg1'].shape, resident),  # bg1
        pl.BlockSpec(wg2t.shape, resident),           # wg2^T (row, f32 for VPU)
        pl.BlockSpec(wc1_b.shape, resident),          # wc1
        pl.BlockSpec(params['bc1'].shape, resident),  # bc1
        pl.BlockSpec(wc2p.shape, resident),           # wc2 (lane-padded, bf16)
        pl.BlockSpec(bc2p.shape, resident),           # bc2 (lane-padded, f32)
    ]
    out_spec = pl.BlockSpec((None, TBG, OUT_PAD), per_step)

    flops = 2 * S * (TBN * TBN * F + TBN * F * H + TBN * H * H + TBN * TBN * H
                     + TBN * H * 128 + TBN * 128 + TBN * TBG * H
                     + TBG * H * 128 + TBG * 128 * OUT_PAD)
    bytes_accessed = sum(int(a.size) * a.dtype.itemsize for a in ins) + S * TBG * OUT_PAD * 4

    out = pl.pallas_call(
        simple_gnn_kernel,
        grid=(S,),
        in_specs=in_specs,
        out_specs=out_spec,
        out_shape=jax.ShapeDtypeStruct((S, TBG, OUT_PAD), f32),
        compiler_params=pltpu.CompilerParams(dimension_semantics=("parallel",)),
        cost_estimate=pl.CostEstimate(flops=flops,
                                      transcendentals=S * (TBN + TBG),
                                      bytes_accessed=bytes_accessed),
    )(*ins)
    # rows within a step are ordered (batch-in-group, graph), so a plain reshape recovers [B,G]
    return out.reshape(B, G, OUT_PAD)[:, :, :2]


def build_normalized_adjacency(src, dst, num_nodes):
    """A_hat = D^{-1/2} (A + I) D^{-1/2}  (GCN symmetric normalization).
    Duplicate edges are deduplicated (.set), i.e. unweighted-adjacency semantics.
    # TODO(synk): for large sparse graphs, replace dense A_hat with a scalar-prefetched
    # neighbor-gather / segment-sum aggregation instead of an O(N^2) matmul.
    """
    A = jnp.zeros((num_nodes, num_nodes), jnp.float32).at[dst, src].set(1.0)
    A = A + jnp.eye(num_nodes, dtype=jnp.float32)
    deg = A.sum(axis=1)
    dinv = 1.0 / jnp.sqrt(deg)
    return dinv[:, None] * A * dinv[None, :]


def ref_forward(x, a_hat, m1, batch_vec, params):
    """Pure-f32 JAX reference mirroring the PyTorch module's forward (true semantics)."""
    def one(xi, ai):
        h = ai @ (xi @ params['w1']) + params['b1']
        h = jnp.maximum(h, 0.0)
        h2 = ai @ (h @ params['w2']) + params['b2']
        h2 = jnp.maximum(h2, 0.0)
        g = jnp.maximum(h2 @ params['wg1'] + params['bg1'], 0.0)
        s = (g @ params['wg2'] + params['bg2'])[:, 0]
        smax = jnp.max(jnp.where(m1 > 0, s[None, :], -1e30), axis=1)   # per-graph max
        e = jnp.exp(s - smax[batch_vec])
        denom = m1 @ e
        w = e / denom[batch_vec]
        pooled = m1 @ (w[:, None] * h2)
        c = jnp.maximum(pooled @ params['wc1'] + params['bc1'], 0.0)
        return c @ params['wc2'] + params['bc2']

    return jax.vmap(one)(x, a_hat)


if __name__ == "__main__":
    # B graph-batches, each: 32 nodes split into 4 graphs of 8-node rings, 16 input features.
    B, F_IN, H, N, G = 8, 16, 64, 32, 4
    nodes_per_graph = N // G
    batch_vec = jnp.repeat(jnp.arange(G), nodes_per_graph)     # graph id of each node

    # undirected ring edges inside each graph -> edge_index [2, E]
    src_list, dst_list = [], []
    for gi in range(G):
        base = gi * nodes_per_graph
        for i in range(nodes_per_graph):
            u = base + i
            v = base + (i + 1) % nodes_per_graph
            src_list += [u, v]
            dst_list += [v, u]
    src = jnp.array(src_list, jnp.int32)
    dst = jnp.array(dst_list, jnp.int32)

    a_hat1 = build_normalized_adjacency(src, dst, N)                            # [N, N]
    m1 = (batch_vec[None, :] == jnp.arange(G)[:, None]).astype(jnp.float32)     # [G, N]

    a_hat = jnp.tile(a_hat1[None], (B, 1, 1))      # [B, N, N]
    mt = jnp.tile(m1.T[None], (B, 1, 1))           # [B, N, G] one-hot node->graph

    key = jax.random.PRNGKey(0)
    keys = jax.random.split(key, 13)

    def init(k, shape, scale=0.1):
        return (scale * jax.random.normal(k, shape)).astype(jnp.float32)

    params = dict(
        w1=init(keys[0], (F_IN, H)),  b1=init(keys[1], (1, H)),
        w2=init(keys[2], (H, H)),     b2=init(keys[3], (1, H)),
        wg1=init(keys[4], (H, 128)),  bg1=init(keys[5], (1, 128)),
        wg2=init(keys[6], (128, 1)),  bg2=init(keys[7], (1, 1)),
        wc1=init(keys[8], (H, 128)),  bc1=init(keys[9], (1, 128)),
        wc2=init(keys[10], (128, 2)), bc2=init(keys[11], (1, 2)),
    )
    x = jax.random.normal(keys[12], (B, N, F_IN), jnp.float32)

    # --- Pallas kernel ---
    out = jax.block_until_ready(simple_gnn_forward(x, a_hat, mt, params))

    # --- pure-f32 reference (true module semantics) ---
    ref = ref_forward(x, a_hat, m1, batch_vec, params)
    assert out.shape == (B, G, 2), out.shape
    max_err = float(jnp.max(jnp.abs(out - ref)))
    # tolerance covers bf16 matmul operands vs the f32 reference
    assert jnp.allclose(out, ref, rtol=2e-2, atol=2e-2), ("max_abs_err", max_err)
    print("KERNEL_OK")
</pallas_src>

<mosaic_0001>
module attributes {stable_mosaic.version = 11 : i64} {
  func.func @simple_gnn_kernel(%arg0: i32, %arg1: memref<1x128x128xbf16, #tpu.memory_space<vmem>>, %arg2: memref<1x128x16xbf16, #tpu.memory_space<vmem>>, %arg3: memref<1x128x16xbf16, #tpu.memory_space<vmem>>, %arg4: memref<16x64xbf16, #tpu.memory_space<vmem>>, %arg5: memref<1x64xf32, #tpu.memory_space<vmem>>, %arg6: memref<64x64xbf16, #tpu.memory_space<vmem>>, %arg7: memref<1x64xf32, #tpu.memory_space<vmem>>, %arg8: memref<64x128xbf16, #tpu.memory_space<vmem>>, %arg9: memref<1x128xf32, #tpu.memory_space<vmem>>, %arg10: memref<1x128xf32, #tpu.memory_space<vmem>>, %arg11: memref<64x128xbf16, #tpu.memory_space<vmem>>, %arg12: memref<1x128xf32, #tpu.memory_space<vmem>>, %arg13: memref<128x128xbf16, #tpu.memory_space<vmem>>, %arg14: memref<1x128xf32, #tpu.memory_space<vmem>>, %arg15: memref<1x16x128xf32, #tpu.memory_space<vmem>>) attributes {dimension_semantics = [#tpu.dimension_semantics<parallel>], iteration_bounds = array<i64: 2>, scalar_prefetch = 0 : i64, scratch_operands = 0 : i64, tpu.core_type = #tpu.core_type<tc>, window_params = [{transform_indices = @transform_0, window_bounds = array<i64: 1, 128, 128>}, {transform_indices = @transform_1, window_bounds = array<i64: 1, 128, 16>}, {transform_indices = @transform_2, window_bounds = array<i64: 1, 128, 16>}, {pipeline_mode = #tpu.pipeline_mode<synchronous>, transform_indices = @transform_3, window_bounds = array<i64: 16, 64>}, {pipeline_mode = #tpu.pipeline_mode<synchronous>, transform_indices = @transform_4, window_bounds = array<i64: 1, 64>}, {pipeline_mode = #tpu.pipeline_mode<synchronous>, transform_indices = @transform_5, window_bounds = array<i64: 64, 64>}, {pipeline_mode = #tpu.pipeline_mode<synchronous>, transform_indices = @transform_6, window_bounds = array<i64: 1, 64>}, {pipeline_mode = #tpu.pipeline_mode<synchronous>, transform_indices = @transform_7, window_bounds = array<i64: 64, 128>}, {pipeline_mode = #tpu.pipeline_mode<synchronous>, transform_indices = @transform_8, window_bounds = array<i64: 1, 128>}, {pipeline_mode = #tpu.pipeline_mode<synchronous>, transform_indices = @transform_9, window_bounds = array<i64: 1, 128>}, {pipeline_mode = #tpu.pipeline_mode<synchronous>, transform_indices = @transform_10, window_bounds = array<i64: 64, 128>}, {pipeline_mode = #tpu.pipeline_mode<synchronous>, transform_indices = @transform_11, window_bounds = array<i64: 1, 128>}, {pipeline_mode = #tpu.pipeline_mode<synchronous>, transform_indices = @transform_12, window_bounds = array<i64: 128, 128>}, {pipeline_mode = #tpu.pipeline_mode<synchronous>, transform_indices = @transform_13, window_bounds = array<i64: 1, 128>}, {transform_indices = @transform_14, window_bounds = array<i64: 1, 16, 128>}]} {
    %c0 = arith.constant 0 : index
    %c0_0 = arith.constant 0 : index
    %c0_1 = arith.constant 0 : index
    %0 = vector.load %arg1[%c0, %c0_0, %c0_1] : memref<1x128x128xbf16, #tpu.memory_space<vmem>>, vector<1x128x128xbf16>
    %1 = vector.shape_cast %0 : vector<1x128x128xbf16> to vector<128x128xbf16>
    %c0_2 = arith.constant 0 : index
    %c0_3 = arith.constant 0 : index
    %c0_4 = arith.constant 0 : index
    %2 = vector.load %arg2[%c0_2, %c0_3, %c0_4] : memref<1x128x16xbf16, #tpu.memory_space<vmem>>, vector<1x128x16xbf16>
    %3 = vector.shape_cast %2 : vector<1x128x16xbf16> to vector<128x16xbf16>
    %c0_5 = arith.constant 0 : index
    %c0_6 = arith.constant 0 : index
    %c0_7 = arith.constant 0 : index
    %4 = vector.load %arg3[%c0_5, %c0_6, %c0_7] : memref<1x128x16xbf16, #tpu.memory_space<vmem>>, vector<1x128x16xbf16>
    %5 = vector.shape_cast %4 : vector<1x128x16xbf16> to vector<128x16xbf16>
    %6 = arith.extf %5 : vector<128x16xbf16> to vector<128x16xf32>
    %cst = arith.constant dense<0.000000e+00> : vector<128x16xf32>
    %7 = tpu.matmul %1, %3, %cst {dimension_numbers = #tpu.dot_dimension_numbers<[1], [0], [0], [1], [0, 0, 1, 1], [], []>} : vector<128x128xbf16>, vector<128x16xbf16>, vector<128x16xf32> -> vector<128x16xf32>
    %8 = arith.truncf %7 : vector<128x16xf32> to vector<128x16xbf16>
    %c0_8 = arith.constant 0 : index
    %c0_9 = arith.constant 0 : index
    %9 = vector.load %arg4[%c0_8, %c0_9] : memref<16x64xbf16, #tpu.memory_space<vmem>>, vector<16x64xbf16>
    %cst_10 = arith.constant dense<0.000000e+00> : vector<128x64xf32>
    %10 = tpu.matmul %8, %9, %cst_10 {dimension_numbers = #tpu.dot_dimension_numbers<[1], [0], [0], [1], [0, 0, 1, 1], [], []>} : vector<128x16xbf16>, vector<16x64xbf16>, vector<128x64xf32> -> vector<128x64xf32>
    %c0_11 = arith.constant 0 : index
    %c0_12 = arith.constant 0 : index
    %11 = vector.load %arg5[%c0_11, %c0_12] : memref<1x64xf32, #tpu.memory_space<vmem>>, vector<1x64xf32>
    %12 = vector.broadcast %11 : vector<1x64xf32> to vector<128x64xf32>
    %13 = arith.addf %10, %12 : vector<128x64xf32>
    %cst_13 = arith.constant 0.000000e+00 : f32
    %14 = vector.broadcast %cst_13 : f32 to vector<128x64xf32>
    %15 = arith.maximumf %13, %14 : vector<128x64xf32>
    %16 = arith.truncf %15 : vector<128x64xf32> to vector<128x64xbf16>
    %c0_14 = arith.constant 0 : index
    %c0_15 = arith.constant 0 : index
    %17 = vector.load %arg6[%c0_14, %c0_15] : memref<64x64xbf16, #tpu.memory_space<vmem>>, vector<64x64xbf16>
    %cst_16 = arith.constant dense<0.000000e+00> : vector<128x64xf32>
    %18 = tpu.matmul %16, %17, %cst_16 {dimension_numbers = #tpu.dot_dimension_numbers<[1], [0], [0], [1], [0, 0, 1, 1], [], []>} : vector<128x64xbf16>, vector<64x64xbf16>, vector<128x64xf32> -> vector<128x64xf32>
    %19 = arith.truncf %18 : vector<128x64xf32> to vector<128x64xbf16>
    %cst_17 = arith.constant dense<0.000000e+00> : vector<128x64xf32>
    %20 = tpu.matmul %1, %19, %cst_17 {dimension_numbers = #tpu.dot_dimension_numbers<[1], [0], [0], [1], [0, 0, 1, 1], [], []>} : vector<128x128xbf16>, vector<128x64xbf16>, vector<128x64xf32> -> vector<128x64xf32>
    %c0_18 = arith.constant 0 : index
    %c0_19 = arith.constant 0 : index
    %21 = vector.load %arg7[%c0_18, %c0_19] : memref<1x64xf32, #tpu.memory_space<vmem>>, vector<1x64xf32>
    %22 = vector.broadcast %21 : vector<1x64xf32> to vector<128x64xf32>
    %23 = arith.addf %20, %22 : vector<128x64xf32>
    %cst_20 = arith.constant 0.000000e+00 : f32
    %24 = vector.broadcast %cst_20 : f32 to vector<128x64xf32>
    %25 = arith.maximumf %23, %24 : vector<128x64xf32>
    %26 = arith.truncf %25 : vector<128x64xf32> to vector<128x64xbf16>
    %c0_21 = arith.constant 0 : index
    %c0_22 = arith.constant 0 : index
    %27 = vector.load %arg8[%c0_21, %c0_22] : memref<64x128xbf16, #tpu.memory_space<vmem>>, vector<64x128xbf16>
    %cst_23 = arith.constant dense<0.000000e+00> : vector<128x128xf32>
    %28 = tpu.matmul %26, %27, %cst_23 {dimension_numbers = #tpu.dot_dimension_numbers<[1], [0], [0], [1], [0, 0, 1, 1], [], []>} : vector<128x64xbf16>, vector<64x128xbf16>, vector<128x128xf32> -> vector<128x128xf32>
    %c0_24 = arith.constant 0 : index
    %c0_25 = arith.constant 0 : index
    %29 = vector.load %arg9[%c0_24, %c0_25] : memref<1x128xf32, #tpu.memory_space<vmem>>, vector<1x128xf32>
    %30 = vector.broadcast %29 : vector<1x128xf32> to vector<128x128xf32>
    %31 = arith.addf %28, %30 : vector<128x128xf32>
    %cst_26 = arith.constant 0.000000e+00 : f32
    %32 = vector.broadcast %cst_26 : f32 to vector<128x128xf32>
    %33 = arith.maximumf %31, %32 : vector<128x128xf32>
    %c0_27 = arith.constant 0 : index
    %c0_28 = arith.constant 0 : index
    %34 = vector.load %arg10[%c0_27, %c0_28] : memref<1x128xf32, #tpu.memory_space<vmem>>, vector<1x128xf32>
    %35 = vector.broadcast %34 : vector<1x128xf32> to vector<128x128xf32>
    %36 = arith.mulf %33, %35 : vector<128x128xf32>
    %cst_29 = arith.constant dense<0.000000e+00> : vector<128xf32>
    %37 = vector.multi_reduction <add>, %36, %cst_29 [1] : vector<128x128xf32> to vector<128xf32>
    %38 = vector.shape_cast %37 : vector<128xf32> to vector<128x1xf32>
    %cst_30 = arith.constant 0.000000e+00 : f32
    %39 = vector.broadcast %cst_30 : f32 to vector<128x16xf32>
    %40 = arith.cmpf ogt, %6, %39 : vector<128x16xf32>
    %41 = vector.shape_cast %38 : vector<128x1xf32> to vector<128x1xf32>
    %42 = vector.broadcast %41 : vector<128x1xf32> to vector<128x16xf32>
    %cst_31 = arith.constant -1.000000e+30 : f32
    %43 = vector.broadcast %cst_31 : f32 to vector<128x16xf32>
    %44 = arith.select %40, %42, %43 : vector<128x16xi1>, vector<128x16xf32>
    %cst_32 = arith.constant dense<0xFF800000> : vector<16xf32>
    %45 = vector.multi_reduction <maximumf>, %44, %cst_32 [0] : vector<128x16xf32> to vector<16xf32>
    %46 = vector.shape_cast %45 : vector<16xf32> to vector<1x16xf32>
    %47 = vector.broadcast %46 : vector<1x16xf32> to vector<128x16xf32>
    %48 = arith.mulf %6, %47 : vector<128x16xf32>
    %cst_33 = arith.constant dense<0.000000e+00> : vector<128xf32>
    %49 = vector.multi_reduction <add>, %48, %cst_33 [1] : vector<128x16xf32> to vector<128xf32>
    %50 = vector.shape_cast %49 : vector<128xf32> to vector<128x1xf32>
    %51 = arith.subf %38, %50 : vector<128x1xf32>
    %52 = math.exp %51 : vector<128x1xf32>
    %53 = vector.broadcast %52 : vector<128x1xf32> to vector<128x16xf32>
    %54 = arith.mulf %6, %53 : vector<128x16xf32>
    %cst_34 = arith.constant dense<0.000000e+00> : vector<16xf32>
    %55 = vector.multi_reduction <add>, %54, %cst_34 [0] : vector<128x16xf32> to vector<16xf32>
    %56 = vector.shape_cast %55 : vector<16xf32> to vector<1x16xf32>
    %57 = tpu.reciprocal %56 : vector<1x16xf32> -> vector<1x16xf32>
    %58 = vector.broadcast %57 : vector<1x16xf32> to vector<128x16xf32>
    %59 = arith.mulf %6, %58 : vector<128x16xf32>
    %cst_35 = arith.constant dense<0.000000e+00> : vector<128xf32>
    %60 = vector.multi_reduction <add>, %59, %cst_35 [1] : vector<128x16xf32> to vector<128xf32>
    %61 = vector.shape_cast %60 : vector<128xf32> to vector<128x1xf32>
    %62 = arith.mulf %52, %61 : vector<128x1xf32>
    %63 = vector.broadcast %62 : vector<128x1xf32> to vector<128x64xf32>
    %64 = arith.mulf %63, %25 : vector<128x64xf32>
    %65 = arith.truncf %64 : vector<128x64xf32> to vector<128x64xbf16>
    "tpu.trace_start"() <{level = 10 : i32, message = "ng,nh->gh"}> : () -> ()
    %cst_36 = arith.constant dense<0.000000e+00> : vector<16x64xf32>
    %66 = tpu.matmul %5, %65, %cst_36 {dimension_numbers = #tpu.dot_dimension_numbers<[0], [0], [1], [1], [0, 1, 1, 1], [], []>} : vector<128x16xbf16>, vector<128x64xbf16>, vector<16x64xf32> -> vector<16x64xf32>
    "tpu.trace_stop"() : () -> ()
    %67 = arith.truncf %66 : vector<16x64xf32> to vector<16x64xbf16>
    %c0_37 = arith.constant 0 : index
    %c0_38 = arith.constant 0 : index
    %68 = vector.load %arg11[%c0_37, %c0_38] : memref<64x128xbf16, #tpu.memory_space<vmem>>, vector<64x128xbf16>
    %cst_39 = arith.constant dense<0.000000e+00> : vector<16x128xf32>
    %69 = tpu.matmul %67, %68, %cst_39 {dimension_numbers = #tpu.dot_dimension_numbers<[1], [0], [0], [1], [0, 0, 1, 1], [], []>} : vector<16x64xbf16>, vector<64x128xbf16>, vector<16x128xf32> -> vector<16x128xf32>
    %c0_40 = arith.constant 0 : index
    %c0_41 = arith.constant 0 : index
    %70 = vector.load %arg12[%c0_40, %c0_41] : memref<1x128xf32, #tpu.memory_space<vmem>>, vector<1x128xf32>
    %71 = vector.broadcast %70 : vector<1x128xf32> to vector<16x128xf32>
    %72 = arith.addf %69, %71 : vector<16x128xf32>
    %cst_42 = arith.constant 0.000000e+00 : f32
    %73 = vector.broadcast %cst_42 : f32 to vector<16x128xf32>
    %74 = arith.maximumf %72, %73 : vector<16x128xf32>
    %75 = arith.truncf %74 : vector<16x128xf32> to vector<16x128xbf16>
    %c0_43 = arith.constant 0 : index
    %c0_44 = arith.constant 0 : index
    %76 = vector.load %arg13[%c0_43, %c0_44] : memref<128x128xbf16, #tpu.memory_space<vmem>>, vector<128x128xbf16>
    %cst_45 = arith.constant dense<0.000000e+00> : vector<16x128xf32>
    %77 = tpu.matmul %75, %76, %cst_45 {dimension_numbers = #tpu.dot_dimension_numbers<[1], [0], [0], [1], [0, 0, 1, 1], [], []>} : vector<16x128xbf16>, vector<128x128xbf16>, vector<16x128xf32> -> vector<16x128xf32>
    %c0_46 = arith.constant 0 : index
    %c0_47 = arith.constant 0 : index
    %78 = vector.load %arg14[%c0_46, %c0_47] : memref<1x128xf32, #tpu.memory_space<vmem>>, vector<1x128xf32>
    %79 = vector.broadcast %78 : vector<1x128xf32> to vector<16x128xf32>
    %80 = arith.addf %77, %79 : vector<16x128xf32>
    %c0_48 = arith.constant 0 : index
    %c0_49 = arith.constant 0 : index
    %c0_50 = arith.constant 0 : index
    %81 = vector.load %arg15[%c0_48, %c0_49, %c0_50] : memref<1x16x128xf32, #tpu.memory_space<vmem>>, vector<1x16x128xf32>
    %82 = vector.shape_cast %81 : vector<1x16x128xf32> to vector<16x128xf32>
    %83 = vector.shape_cast %80 : vector<16x128xf32> to vector<1x16x128xf32>
    tpu.vector_store %arg15[%c0_48, %c0_49, %c0_50], %83 {strides = array<i32>} : memref<1x16x128xf32, #tpu.memory_space<vmem>>, vector<1x16x128xf32>,
    return
  }
  func.func @transform_0(%arg0: i32) -> (i32, i32, i32) {
    %c0_i32 = arith.constant 0 : i32
    %c0_i32_0 = arith.constant 0 : i32
    %c0_i32_1 = arith.constant 0 : i32
    return %arg0, %c0_i32, %c0_i32_0 : i32, i32, i32
  }
  func.func @transform_1(%arg0: i32) -> (i32, i32, i32) {
    %c0_i32 = arith.constant 0 : i32
    %c0_i32_0 = arith.constant 0 : i32
    %c0_i32_1 = arith.constant 0 : i32
    return %arg0, %c0_i32, %c0_i32_0 : i32, i32, i32
  }
  func.func @transform_2(%arg0: i32) -> (i32, i32, i32) {
    %c0_i32 = arith.constant 0 : i32
    %c0_i32_0 = arith.constant 0 : i32
    %c0_i32_1 = arith.constant 0 : i32
    return %arg0, %c0_i32, %c0_i32_0 : i32, i32, i32
  }
  func.func @transform_3(%arg0: i32) -> (i32, i32) {
    %c0_i32 = arith.constant 0 : i32
    %c0_i32_0 = arith.constant 0 : i32
    %c0_i32_1 = arith.constant 0 : i32
    return %c0_i32, %c0_i32_0 : i32, i32
  }
  func.func @transform_4(%arg0: i32) -> (i32, i32) {
    %c0_i32 = arith.constant 0 : i32
    %c0_i32_0 = arith.constant 0 : i32
    %c0_i32_1 = arith.constant 0 : i32
    return %c0_i32, %c0_i32_0 : i32, i32
  }
  func.func @transform_5(%arg0: i32) -> (i32, i32) {
    %c0_i32 = arith.constant 0 : i32
    %c0_i32_0 = arith.constant 0 : i32
    %c0_i32_1 = arith.constant 0 : i32
    return %c0_i32, %c0_i32_0 : i32, i32
  }
  func.func @transform_6(%arg0: i32) -> (i32, i32) {
    %c0_i32 = arith.constant 0 : i32
    %c0_i32_0 = arith.constant 0 : i32
    %c0_i32_1 = arith.constant 0 : i32
    return %c0_i32, %c0_i32_0 : i32, i32
  }
  func.func @transform_7(%arg0: i32) -> (i32, i32) {
    %c0_i32 = arith.constant 0 : i32
    %c0_i32_0 = arith.constant 0 : i32
    %c0_i32_1 = arith.constant 0 : i32
    return %c0_i32, %c0_i32_0 : i32, i32
  }
  func.func @transform_8(%arg0: i32) -> (i32, i32) {
    %c0_i32 = arith.constant 0 : i32
    %c0_i32_0 = arith.constant 0 : i32
    %c0_i32_1 = arith.constant 0 : i32
    return %c0_i32, %c0_i32_0 : i32, i32
  }
  func.func @transform_9(%arg0: i32) -> (i32, i32) {
    %c0_i32 = arith.constant 0 : i32
    %c0_i32_0 = arith.constant 0 : i32
    %c0_i32_1 = arith.constant 0 : i32
    return %c0_i32, %c0_i32_0 : i32, i32
  }
  func.func @transform_10(%arg0: i32) -> (i32, i32) {
    %c0_i32 = arith.constant 0 : i32
    %c0_i32_0 = arith.constant 0 : i32
    %c0_i32_1 = arith.constant 0 : i32
    return %c0_i32, %c0_i32_0 : i32, i32
  }
  func.func @transform_11(%arg0: i32) -> (i32, i32) {
    %c0_i32 = arith.constant 0 : i32
    %c0_i32_0 = arith.constant 0 : i32
    %c0_i32_1 = arith.constant 0 : i32
    return %c0_i32, %c0_i32_0 : i32, i32
  }
  func.func @transform_12(%arg0: i32) -> (i32, i32) {
    %c0_i32 = arith.constant 0 : i32
    %c0_i32_0 = arith.constant 0 : i32
    %c0_i32_1 = arith.constant 0 : i32
    return %c0_i32, %c0_i32_0 : i32, i32
  }
  func.func @transform_13(%arg0: i32) -> (i32, i32) {
    %c0_i32 = arith.constant 0 : i32
    %c0_i32_0 = arith.constant 0 : i32
    %c0_i32_1 = arith.constant 0 : i32
    return %c0_i32, %c0_i32_0 : i32, i32
  }
  func.func @transform_14(%arg0: i32) -> (i32, i32, i32) {
    %c0_i32 = arith.constant 0 : i32
    %c0_i32_0 = arith.constant 0 : i32
    %c0_i32_1 = arith.constant 0 : i32
    return %arg0, %c0_i32, %c0_i32_0 : i32, i32, i32
  }
}

</mosaic_0001>

<llo_original>
// kernel: tpu_custom_call.1
$region0: #{tpu_custom_call.1}
  #allocation0 [shape = 'u32[]', space=smem, size = 0x4, offset = 0x4, fixed_abs, tag = 'smem constant byte address 0x4 - core index']
  #allocation1 [shape = 'u32[144,128]{1,0:T(1,128)}', space=vmem, size = 0x12000, scoped, tag = 'internal scratch']
  %s0 = inlined_call_operand.vmem [shape: bf16[2,128,128], index: 0, kind: input, shape index: {}]
  %s1 = inlined_call_operand.vmem [shape: bf16[2,128,16], index: 1, kind: input, shape index: {}]
  %s2 = inlined_call_operand.vmem [shape: bf16[2,128,16], index: 2, kind: input, shape index: {}]
  %s3 = inlined_call_operand.vmem [shape: bf16[16,64], index: 3, kind: input, shape index: {}]
  %s4 = inlined_call_operand.vmem [shape: f32[1,64], index: 4, kind: input, shape index: {}]
  %s5 = inlined_call_operand.vmem [shape: bf16[64,64], index: 5, kind: input, shape index: {}]
  %s6 = inlined_call_operand.vmem [shape: f32[1,64], index: 6, kind: input, shape index: {}]
  %s7 = inlined_call_operand.vmem [shape: bf16[64,128], index: 7, kind: input, shape index: {}]
  %s8 = inlined_call_operand.vmem [shape: f32[1,128], index: 8, kind: input, shape index: {}]
  %s9 = inlined_call_operand.vmem [shape: f32[1,128], index: 9, kind: input, shape index: {}]
  %s10 = inlined_call_operand.vmem [shape: bf16[64,128], index: 10, kind: input, shape index: {}]
  %s11 = inlined_call_operand.vmem [shape: f32[1,128], index: 11, kind: input, shape index: {}]
  %s12 = inlined_call_operand.vmem [shape: bf16[128,128], index: 12, kind: input, shape index: {}]
  %s13 = inlined_call_operand.vmem [shape: f32[1,128], index: 13, kind: input, shape index: {}]
  %s14 = inlined_call_operand.hbm [shape: f32[2,16,128], index: 14, kind: output, shape index: {}]
  %s15 = sld [smem:[#allocation0]]
  $region89: #{tpu_custom_call.1} parent=0
    _
  %s17 = ssub.s32 1, %s15
  %s18 = scalar_select 0, %s17, %s15
  $region1: #{tpu_custom_call.1} parent=0
    #allocation2 [shape = 'u8[16384]{0}', space=vmem, size = 0x4000, scoped, tag = 'output window, operand 0']
    #allocation3 [shape = 's32[2]{0}', space=sflag, size = 0x8, scoped, tag = 'scoped memory for tpu_custom_call.1']
    %19 = vsyncpa [#allocation3], 0
    %s20 = scalar_lea.sflag [#allocation3], 1
    %21 = vsyncpa %s20, 0
    loop: start=0, step=1, limit=4
    $region2: #{tpu_custom_call.1} parent=1 // loop_pre_header
      _
    $region3: #{tpu_custom_call.1} parent=1 // loop_header
      %s23 = sphi 0, %s27
      %p24 = scmp.ge.s32.totalorder %s23, 4
      %s33 = sphi 0, %s35
      %s36 = sphi 0, %s33
      %s37 = sphi 0, %s36
      %s53 = sphi 0, %s37
      %s59 = sphi 0, %s61
      %s62 = sphi 0, %s59
      %s63 = sphi 0, %s62
      %s79 = sphi 0, %s63
      %s85 = sphi 0, %s87
      %s88 = sphi 0, %s85
      %s89 = sphi 0, %s88
      %s105 = sphi 0, %s89
      %s109 = sphi 0, %s109
      %s111 = sphi 0, %s109
      %s112 = sphi 0, %s111
      %s126 = sphi 0, %s112
      %s130 = sphi 0, %s130
      %s132 = sphi 0, %s130
      %s133 = sphi 0, %s132
      %s147 = sphi 0, %s133
      %s151 = sphi 0, %s151
      %s153 = sphi 0, %s151
      %s154 = sphi 0, %s153
      %s168 = sphi 0, %s154
      %s172 = sphi 0, %s172
      %s174 = sphi 0, %s172
      %s175 = sphi 0, %s174
      %s189 = sphi 0, %s175
      %s193 = sphi 0, %s193
      %s195 = sphi 0, %s193
      %s196 = sphi 0, %s195
      %s210 = sphi 0, %s196
      %s214 = sphi 0, %s214
      %s216 = sphi 0, %s214
      %s217 = sphi 0, %s216
      %s231 = sphi 0, %s217
      %s235 = sphi 0, %s235
      %s237 = sphi 0, %s235
      %s238 = sphi 0, %s237
      %s252 = sphi 0, %s238
      %s256 = sphi 0, %s256
      %s258 = sphi 0, %s256
      %s259 = sphi 0, %s258
      %s273 = sphi 0, %s259
      %s277 = sphi 0, %s277
      %s279 = sphi 0, %s277
      %s280 = sphi 0, %s279
      %s294 = sphi 0, %s280
      %s298 = sphi 0, %s298
      %s300 = sphi 0, %s298
      %s301 = sphi 0, %s300
      %s315 = sphi 0, %s301
      %s319 = sphi 0, %s319
      %s321 = sphi 0, %s319
      %s322 = sphi 0, %s321
      %s336 = sphi 0, %s322
      %s342 = sphi 0, %s344
      %s345 = sphi 0, %s342
      %s346 = sphi 0, %s345
      %s362 = sphi 0, %s346
    $region4: #{tpu_custom_call.1} parent=1 // loop_header_branch
      %26 = sbr.rel (%p24) target = $region8
    $region5: #{tpu_custom_call.1} parent=1 // loop_body
      %s28 = ssub.s32 %s23, 1
      %s29 = ssub.s32 %s23, 2
      %s30 = sadd.s32 %s23, 1
      %s31 = ssub.s32 %s23, %s30
      %p32 = scmp.eq.s32.totalorder %s31, 0
      %s34 = sadd.s32 %s33, 1
      %s35 = scalar_select %p32, %s33, %s34
      %p38 = pneg %p32
      %p39 = scmp.eq.s32.totalorder %s23, 1
      %p40 = por %p38, %p39
      %p41 = scmp.ne.s32.totalorder %s33, %s36
      %p42 = scmp.eq.s32.totalorder %s23, 0
      %p43 = por %p41, %p42
      %p44 = scmp.ne.s32.totalorder %s33, %s36
      %p45 = scmp.eq.s32.totalorder %s28, 1
      %p46 = por %p44, %p45
      %p47 = scmp.ne.s32.totalorder %s36, %s37
      %p48 = scmp.eq.s32.totalorder %s28, 0
      %p49 = por %p47, %p48
      %p50 = scmp.ne.s32.totalorder %s36, %s37
      %p51 = scmp.eq.s32.totalorder %s29, 1
      %p52 = por %p50, %p51
      %p54 = scmp.ne.s32.totalorder %s37, %s53
      %p55 = scmp.eq.s32.totalorder %s29, 0
      %p56 = por %p54, %p55
      %s57 = ssub.s32 %s23, %s30
      %p58 = scmp.eq.s32.totalorder %s57, 0
      %s60 = sadd.s32 %s59, 1
      %s61 = scalar_select %p58, %s59, %s60
      %p64 = pneg %p58
      %p65 = scmp.eq.s32.totalorder %s23, 1
      %p66 = por %p64, %p65
      %p67 = scmp.ne.s32.totalorder %s59, %s62
      %p68 = scmp.eq.s32.totalorder %s23, 0
      %p69 = por %p67, %p68
      %p70 = scmp.ne.s32.totalorder %s59, %s62
      %p71 = scmp.eq.s32.totalorder %s28, 1
      %p72 = por %p70, %p71
      %p73 = scmp.ne.s32.totalorder %s62, %s63
      %p74 = scmp.eq.s32.totalorder %s28, 0
      %p75 = por %p73, %p74
      %p76 = scmp.ne.s32.totalorder %s62, %s63
      %p77 = scmp.eq.s32.totalorder %s29, 1
      %p78 = por %p76, %p77
      %p80 = scmp.ne.s32.totalorder %s63, %s79
      %p81 = scmp.eq.s32.totalorder %s29, 0
      %p82 = por %p80, %p81
      %s83 = ssub.s32 %s23, %s30
      %p84 = scmp.eq.s32.totalorder %s83, 0
      %s86 = sadd.s32 %s85, 1
      %s87 = scalar_select %p84, %s85, %s86
      %p90 = pneg %p84
      %p91 = scmp.eq.s32.totalorder %s23, 1
      %p92 = por %p90, %p91
      %p93 = scmp.ne.s32.totalorder %s85, %s88
      %p94 = scmp.eq.s32.totalorder %s23, 0
      %p95 = por %p93, %p94
      %p96 = scmp.ne.s32.totalorder %s85, %s88
      %p97 = scmp.eq.s32.totalorder %s28, 1
      %p98 = por %p96, %p97
      %p99 = scmp.ne.s32.totalorder %s88, %s89
      %p100 = scmp.eq.s32.totalorder %s28, 0
      %p101 = por %p99, %p100
      %p102 = scmp.ne.s32.totalorder %s88, %s89
      %p103 = scmp.eq.s32.totalorder %s29, 1
      %p104 = por %p102, %p103
      %p106 = scmp.ne.s32.totalorder %s89, %s105
      %p107 = scmp.eq.s32.totalorder %s29, 0
      %p108 = por %p106, %p107
      %s110 = sadd.s32 %s109, 1
      %p113 = scmp.eq.s32.totalorder %s23, 1
      %p114 = scmp.ne.s32.totalorder %s109, %s111
      %p115 = scmp.eq.s32.totalorder %s23, 0
      %p116 = por %p114, %p115
      %p117 = scmp.ne.s32.totalorder %s109, %s111
      %p118 = scmp.eq.s32.totalorder %s28, 1
      %p119 = por %p117, %p118
      %p120 = scmp.ne.s32.totalorder %s111, %s112
      %p121 = scmp.eq.s32.totalorder %s28, 0
      %p122 = por %p120, %p121
      %p123 = scmp.ne.s32.totalorder %s111, %s112
      %p124 = scmp.eq.s32.totalorder %s29, 1
      %p125 = por %p123, %p124
      %p127 = scmp.ne.s32.totalorder %s112, %s126
      %p128 = scmp.eq.s32.totalorder %s29, 0
      %p129 = por %p127, %p128
      %s131 = sadd.s32 %s130, 1
      %p134 = scmp.eq.s32.totalorder %s23, 1
      %p135 = scmp.ne.s32.totalorder %s130, %s132
      %p136 = scmp.eq.s32.totalorder %s23, 0
      %p137 = por %p135, %p136
      %p138 = scmp.ne.s32.totalorder %s130, %s132
      %p139 = scmp.eq.s32.totalorder %s28, 1
      %p140 = por %p138, %p139
      %p141 = scmp.ne.s32.totalorder %s132, %s133
      %p142 = scmp.eq.s32.totalorder %s28, 0
      %p143 = por %p141, %p142
      %p144 = scmp.ne.s32.totalorder %s132, %s133
      %p145 = scmp.eq.s32.totalorder %s29, 1
      %p146 = por %p144, %p145
      %p148 = scmp.ne.s32.totalorder %s133, %s147
      %p149 = scmp.eq.s32.totalorder %s29, 0
      %p150 = por %p148, %p149
      %s152 = sadd.s32 %s151, 1
      %p155 = scmp.eq.s32.totalorder %s23, 1
      %p156 = scmp.ne.s32.totalorder %s151, %s153
      %p157 = scmp.eq.s32.totalorder %s23, 0
      %p158 = por %p156, %p157
      %p159 = scmp.ne.s32.totalorder %s151, %s153
      %p160 = scmp.eq.s32.totalorder %s28, 1
      %p161 = por %p159, %p160
      %p162 = scmp.ne.s32.totalorder %s153, %s154
      %p163 = scmp.eq.s32.totalorder %s28, 0
      %p164 = por %p162, %p163
      %p165 = scmp.ne.s32.totalorder %s153, %s154
      %p166 = scmp.eq.s32.totalorder %s29, 1
      %p167 = por %p165, %p166
      %p169 = scmp.ne.s32.totalorder %s154, %s168
      %p170 = scmp.eq.s32.totalorder %s29, 0
      %p171 = por %p169, %p170
      %s173 = sadd.s32 %s172, 1
      %p176 = scmp.eq.s32.totalorder %s23, 1
      %p177 = scmp.ne.s32.totalorder %s172, %s174
      %p178 = scmp.eq.s32.totalorder %s23, 0
      %p179 = por %p177, %p178
      %p180 = scmp.ne.s32.totalorder %s172, %s174
      %p181 = scmp.eq.s32.totalorder %s28, 1
      %p182 = por %p180, %p181
      %p183 = scmp.ne.s32.totalorder %s174, %s175
      %p184 = scmp.eq.s32.totalorder %s28, 0
      %p185 = por %p183, %p184
      %p186 = scmp.ne.s32.totalorder %s174, %s175
      %p187 = scmp.eq.s32.totalorder %s29, 1
      %p188 = por %p186, %p187
      %p190 = scmp.ne.s32.totalorder %s175, %s189
      %p191 = scmp.eq.s32.totalorder %s29, 0
      %p192 = por %p190, %p191
      %s194 = sadd.s32 %s193, 1
      %p197 = scmp.eq.s32.totalorder %s23, 1
      %p198 = scmp.ne.s32.totalorder %s193, %s195
      %p199 = scmp.eq.s32.totalorder %s23, 0
      %p200 = por %p198, %p199
      %p201 = scmp.ne.s32.totalorder %s193, %s195
      %p202 = scmp.eq.s32.totalorder %s28, 1
      %p203 = por %p201, %p202
      %p204 = scmp.ne.s32.totalorder %s195, %s196
      %p205 = scmp.eq.s32.totalorder %s28, 0
      %p206 = por %p204, %p205
      %p207 = scmp.ne.s32.totalorder %s195, %s196
      %p208 = scmp.eq.s32.totalorder %s29, 1
      %p209 = por %p207, %p208
      %p211 = scmp.ne.s32.totalorder %s196, %s210
      %p212 = scmp.eq.s32.totalorder %s29, 0
      %p213 = por %p211, %p212
      %s215 = sadd.s32 %s214, 1
      %p218 = scmp.eq.s32.totalorder %s23, 1
      %p219 = scmp.ne.s32.totalorder %s214, %s216
      %p220 = scmp.eq.s32.totalorder %s23, 0
      %p221 = por %p219, %p220
      %p222 = scmp.ne.s32.totalorder %s214, %s216
      %p223 = scmp.eq.s32.totalorder %s28, 1
      %p224 = por %p222, %p223
      %p225 = scmp.ne.s32.totalorder %s216, %s217
      %p226 = scmp.eq.s32.totalorder %s28, 0
      %p227 = por %p225, %p226
      %p228 = scmp.ne.s32.totalorder %s216, %s217
      %p229 = scmp.eq.s32.totalorder %s29, 1
      %p230 = por %p228, %p229
      %p232 = scmp.ne.s32.totalorder %s217, %s231
      %p233 = scmp.eq.s32.totalorder %s29, 0
      %p234 = por %p232, %p233
      %s236 = sadd.s32 %s235, 1
      %p239 = scmp.eq.s32.totalorder %s23, 1
      %p240 = scmp.ne.s32.totalorder %s235, %s237
      %p241 = scmp.eq.s32.totalorder %s23, 0
      %p242 = por %p240, %p241
      %p243 = scmp.ne.s32.totalorder %s235, %s237
      %p244 = scmp.eq.s32.totalorder %s28, 1
      %p245 = por %p243, %p244
      %p246 = scmp.ne.s32.totalorder %s237, %s238
      %p247 = scmp.eq.s32.totalorder %s28, 0
      %p248 = por %p246, %p247
      %p249 = scmp.ne.s32.totalorder %s237, %s238
      %p250 = scmp.eq.s32.totalorder %s29, 1
      %p251 = por %p249, %p250
      %p253 = scmp.ne.s32.totalorder %s238, %s252
      %p254 = scmp.eq.s32.totalorder %s29, 0
      %p255 = por %p253, %p254
      %s257 = sadd.s32 %s256, 1
      %p260 = scmp.eq.s32.totalorder %s23, 1
      %p261 = scmp.ne.s32.totalorder %s256, %s258
      %p262 = scmp.eq.s32.totalorder %s23, 0
      %p263 = por %p261, %p262
      %p264 = scmp.ne.s32.totalorder %s256, %s258
      %p265 = scmp.eq.s32.totalorder %s28, 1
      %p266 = por %p264, %p265
      %p267 = scmp.ne.s32.totalorder %s258, %s259
      %p268 = scmp.eq.s32.totalorder %s28, 0
      %p269 = por %p267, %p268
      %p270 = scmp.ne.s32.totalorder %s258, %s259
      %p271 = scmp.eq.s32.totalorder %s29, 1
      %p272 = por %p270, %p271
      %p274 = scmp.ne.s32.totalorder %s259, %s273
      %p275 = scmp.eq.s32.totalorder %s29, 0
      %p276 = por %p274, %p275
      %s278 = sadd.s32 %s277, 1
      %p281 = scmp.eq.s32.totalorder %s23, 1
      %p282 = scmp.ne.s32.totalorder %s277, %s279
      %p283 = scmp.eq.s32.totalorder %s23, 0
      %p284 = por %p282, %p283
      %p285 = scmp.ne.s32.totalorder %s277, %s279
      %p286 = scmp.eq.s32.totalorder %s28, 1
      %p287 = por %p285, %p286
      %p288 = scmp.ne.s32.totalorder %s279, %s280
      %p289 = scmp.eq.s32.totalorder %s28, 0
      %p290 = por %p288, %p289
      %p291 = scmp.ne.s32.totalorder %s279, %s280
      %p292 = scmp.eq.s32.totalorder %s29, 1
      %p293 = por %p291, %p292
      %p295 = scmp.ne.s32.totalorder %s280, %s294
      %p296 = scmp.eq.s32.totalorder %s29, 0
      %p297 = por %p295, %p296
      %s299 = sadd.s32 %s298, 1
      %p302 = scmp.eq.s32.totalorder %s23, 1
      %p303 = scmp.ne.s32.totalorder %s298, %s300
      %p304 = scmp.eq.s32.totalorder %s23, 0
      %p305 = por %p303, %p304
      %p306 = scmp.ne.s32.totalorder %s298, %s300
      %p307 = scmp.eq.s32.totalorder %s28, 1
      %p308 = por %p306, %p307
      %p309 = scmp.ne.s32.totalorder %s300, %s301
      %p310 = scmp.eq.s32.totalorder %s28, 0
      %p311 = por %p309, %p310
      %p312 = scmp.ne.s32.totalorder %s300, %s301
      %p313 = scmp.eq.s32.totalorder %s29, 1
      %p314 = por %p312, %p313
      %p316 = scmp.ne.s32.totalorder %s301, %s315
      %p317 = scmp.eq.s32.totalorder %s29, 0
      %p318 = por %p316, %p317
      %s320 = sadd.s32 %s319, 1
      %p323 = scmp.eq.s32.totalorder %s23, 1
      %p324 = scmp.ne.s32.totalorder %s319, %s321
      %p325 = scmp.eq.s32.totalorder %s23, 0
      %p326 = por %p324, %p325
      %p327 = scmp.ne.s32.totalorder %s319, %s321
      %p328 = scmp.eq.s32.totalorder %s28, 1
      %p329 = por %p327, %p328
      %p330 = scmp.ne.s32.totalorder %s321, %s322
      %p331 = scmp.eq.s32.totalorder %s28, 0
      %p332 = por %p330, %p331
      %p333 = scmp.ne.s32.totalorder %s321, %s322
      %p334 = scmp.eq.s32.totalorder %s29, 1
      %p335 = por %p333, %p334
      %p337 = scmp.ne.s32.totalorder %s322, %s336
      %p338 = scmp.eq.s32.totalorder %s29, 0
      %p339 = por %p337, %p338
      %s340 = ssub.s32 %s23, %s30
      %p341 = scmp.eq.s32.totalorder %s340, 0
      %s343 = sadd.s32 %s342, 1
      %s344 = scalar_select %p341, %s342, %s343
      %p347 = pneg %p341
      %p348 = scmp.eq.s32.totalorder %s23, 1
      %p349 = por %p347, %p348
      %p350 = scmp.ne.s32.totalorder %s342, %s345
      %p351 = scmp.eq.s32.totalorder %s23, 0
      %p352 = por %p350, %p351
      %p353 = scmp.ne.s32.totalorder %s342, %s345
      %p354 = scmp.eq.s32.totalorder %s28, 1
      %p355 = por %p353, %p354
      %p356 = scmp.ne.s32.totalorder %s345, %s346
      %p357 = scmp.eq.s32.totalorder %s28, 0
      %p358 = por %p356, %p357
      %p359 = scmp.ne.s32.totalorder %s345, %s346
      %p360 = scmp.eq.s32.totalorder %s29, 1
      %p361 = por %p359, %p360
      %p363 = scmp.ne.s32.totalorder %s346, %s362
      %p364 = scmp.eq.s32.totalorder %s29, 0
      %p365 = por %p363, %p364
      %p366 = scmp.le.s32.totalorder 1, %s23
      %p367 = scmp.lt.s32.totalorder %s23, 3
      %p368 = pnand %p366, %p367
      %p369 = pneg %p368
      // Predicated region
      $region9: #{tpu_custom_call.1} parent=5 // pred_check
        _
      $region10: #{tpu_custom_call.1} parent=5 // pred_check_branch
        %371 = sbr.rel (%p368) target = $region12
      $region11: #{tpu_custom_call.1} parent=5 // pred_region
        %s372 = ssub.s32 %s23, 1
        // Predicated region
        $region13: #{tpu_custom_call.1} parent=11 // pred_check
          %p373 = pneg %p122
        $region14: #{tpu_custom_call.1} parent=11 // pred_check_branch
          %375 = sbr.rel (%p373) target = $region16
        $region15: #{tpu_custom_call.1} parent=11 // pred_region
          _
        $region16: #{tpu_custom_call.1} parent=11 // pred_fallthru
          _
        // Predicated region
        $region17: #{tpu_custom_call.1} parent=11 // pred_check
          %p376 = pneg %p143
        $region18: #{tpu_custom_call.1} parent=11 // pred_check_branch
          %378 = sbr.rel (%p376) target = $region20
        $region19: #{tpu_custom_call.1} parent=11 // pred_region
          _
        $region20: #{tpu_custom_call.1} parent=11 // pred_fallthru
          _
        // Predicated region
        $region21: #{tpu_custom_call.1} parent=11 // pred_check
          %p379 = pneg %p164
        $region22: #{tpu_custom_call.1} parent=11 // pred_check_branch
          %381 = sbr.rel (%p379) target = $region24
        $region23: #{tpu_custom_call.1} parent=11 // pred_region
          _
        $region24: #{tpu_custom_call.1} parent=11 // pred_fallthru
          _
        // Predicated region
        $region25: #{tpu_custom_call.1} parent=11 // pred_check
          %p382 = pneg %p185
        $region26: #{tpu_custom_call.1} parent=11 // pred_check_branch
          %384 = sbr.rel (%p382) target = $region28
        $region27: #{tpu_custom_call.1} parent=11 // pred_region
          _
        $region28: #{tpu_custom_call.1} parent=11 // pred_fallthru
          _
        // Predicated region
        $region29: #{tpu_custom_call.1} parent=11 // pred_check
          %p385 = pneg %p206
        $region30: #{tpu_custom_call.1} parent=11 // pred_check_branch
          %387 = sbr.rel (%p385) target = $region32
        $region31: #{tpu_custom_call.1} parent=11 // pred_region
          _
        $region32: #{tpu_custom_call.1} parent=11 // pred_fallthru
          _
        // Predicated region
        $region33: #{tpu_custom_call.1} parent=11 // pred_check
          %p388 = pneg %p227
        $region34: #{tpu_custom_call.1} parent=11 // pred_check_branch
          %390 = sbr.rel (%p388) target = $region36
        $region35: #{tpu_custom_call.1} parent=11 // pred_region
          _
        $region36: #{tpu_custom_call.1} parent=11 // pred_fallthru
          _
        // Predicated region
        $region37: #{tpu_custom_call.1} parent=11 // pred_check
          %p391 = pneg %p248
        $region38: #{tpu_custom_call.1} parent=11 // pred_check_branch
          %393 = sbr.rel (%p391) target = $region40
        $region39: #{tpu_custom_call.1} parent=11 // pred_region
          _
        $region40: #{tpu_custom_call.1} parent=11 // pred_fallthru
          _
        // Predicated region
        $region41: #{tpu_custom_call.1} parent=11 // pred_check
          %p394 = pneg %p269
        $region42: #{tpu_custom_call.1} parent=11 // pred_check_branch
          %396 = sbr.rel (%p394) target = $region44
        $region43: #{tpu_custom_call.1} parent=11 // pred_region
          _
        $region44: #{tpu_custom_call.1} parent=11 // pred_fallthru
          _
        // Predicated region
        $region45: #{tpu_custom_call.1} parent=11 // pred_check
          %p397 = pneg %p290
        $region46: #{tpu_custom_call.1} parent=11 // pred_check_branch
          %399 = sbr.rel (%p397) target = $region48
        $region47: #{tpu_custom_call.1} parent=11 // pred_region
          _
        $region48: #{tpu_custom_call.1} parent=11 // pred_fallthru
          _
        // Predicated region
        $region49: #{tpu_custom_call.1} parent=11 // pred_check
          %p400 = pneg %p311
        $region50: #{tpu_custom_call.1} parent=11 // pred_check_branch
          %402 = sbr.rel (%p400) target = $region52
        $region51: #{tpu_custom_call.1} parent=11 // pred_region
          _
        $region52: #{tpu_custom_call.1} parent=11 // pred_fallthru
          _
        // Predicated region
        $region53: #{tpu_custom_call.1} parent=11 // pred_check
          %p403 = pneg %p332
        $region54: #{tpu_custom_call.1} parent=11 // pred_check_branch
          %405 = sbr.rel (%p403) target = $region56
        $region55: #{tpu_custom_call.1} parent=11 // pred_region
          _
        $region56: #{tpu_custom_call.1} parent=11 // pred_fallthru
          _
      $region12: #{tpu_custom_call.1} parent=5 // pred_fallthru
        _
      %p406 = scmp.lt.s32.totalorder %s23, 2
      // Predicated region
      $region57: #{tpu_custom_call.1} parent=5 // pred_check
        %p407 = pneg %p406
      $region58: #{tpu_custom_call.1} parent=5 // pred_check_branch
        %409 = sbr.rel (%p407) target = $region60
      $region59: #{tpu_custom_call.1} parent=5 // pred_region
        // Predicated region
        $region61: #{tpu_custom_call.1} parent=59 // pred_check
          %p410 = pneg %p43
        $region62: #{tpu_custom_call.1} parent=59 // pred_check_branch
          %412 = sbr.rel (%p410) target = $region64
        $region63: #{tpu_custom_call.1} parent=59 // pred_region
          %p413 = scmp.lt.s32.totalorder %s23, 1
          %s414 = scalar_select %p413, %s23, 1
          %s415 = smul.addr %s414, 16
          %s416 = smul.addr %s415, 4
          %s417 = scalar_lea.vmem %s0, %s416
        $region64: #{tpu_custom_call.1} parent=59 // pred_fallthru
          _
        // Predicated region
        $region65: #{tpu_custom_call.1} parent=59 // pred_check
          %p418 = pneg %p69
        $region66: #{tpu_custom_call.1} parent=59 // pred_check_branch
          %420 = sbr.rel (%p418) target = $region68
        $region67: #{tpu_custom_call.1} parent=59 // pred_region
          %p421 = scmp.lt.s32.totalorder %s23, 1
          %s422 = scalar_select %p421, %s23, 1
          %s423 = smul.addr %s422, 16
          %s424 = smul.addr %s423, 4
          %s425 = scalar_lea.vmem %s1, %s424
        $region68: #{tpu_custom_call.1} parent=59 // pred_fallthru
          _
        // Predicated region
        $region69: #{tpu_custom_call.1} parent=59 // pred_check
          %p426 = pneg %p95
        $region70: #{tpu_custom_call.1} parent=59 // pred_check_branch
          %428 = sbr.rel (%p426) target = $region72
        $region71: #{tpu_custom_call.1} parent=59 // pred_region
          %p429 = scmp.lt.s32.totalorder %s23, 1
          %s430 = scalar_select %p429, %s23, 1
          %s431 = smul.addr %s430, 16
          %s432 = smul.addr %s431, 4
          %s433 = scalar_lea.vmem %s2, %s432
        $region72: #{tpu_custom_call.1} parent=59 // pred_fallthru
          _
      $region60: #{tpu_custom_call.1} parent=5 // pred_fallthru
        _
      %p434 = scmp.le.s32.totalorder 1, %s23
      %p435 = scmp.lt.s32.totalorder %s23, 3
      %p436 = pnand %p434, %p435
      %p437 = pneg %p436
      // Predicated region
      $region73: #{tpu_custom_call.1} parent=5 // pred_check
        _
      $region74: #{tpu_custom_call.1} parent=5 // pred_check_branch
        %439 = sbr.rel (%p436) target = $region76
      $region75: #{tpu_custom_call.1} parent=5 // pred_region
        %s440 = ssub.s32 %s23, 1
        %p441 = scmp.lt.s32.totalorder %s28, 1
        %s442 = scalar_select %p441, %s28, 1
        %s443 = smul.addr %s442, 16
        %s444 = smul.addr %s443, 4
        %s445 = scalar_lea.vmem %s0, %s444
        %p446 = pneg %p49
        %p447 = pneg %p46
        %p448 = scmp.lt.s32.totalorder %s28, 1
        %s449 = scalar_select %p448, %s28, 1
        %s450 = smul.addr %s449, 16
        %s451 = smul.addr %s450, 4
        %s452 = scalar_lea.vmem %s1, %s451
        %p453 = pneg %p75
        %p454 = pneg %p72
        %p455 = scmp.lt.s32.totalorder %s28, 1
        %s456 = scalar_select %p455, %s28, 1
        %s457 = smul.addr %s456, 16
        %s458 = smul.addr %s457, 4
        %s459 = scalar_lea.vmem %s2, %s458
        %p460 = pneg %p101
        %p461 = pneg %p98
        %p462 = pneg %p122
        %p463 = pneg %p119
        %p464 = pneg %p143
        %p465 = pneg %p140
        %p466 = pneg %p164
        %p467 = pneg %p161
        %p468 = pneg %p185
        %p469 = pneg %p182
        %p470 = pneg %p206
        %p471 = pneg %p203
        %p472 = pneg %p227
        %p473 = pneg %p224
        %p474 = pneg %p248
        %p475 = pneg %p245
        %p476 = pneg %p269
        %p477 = pneg %p266
        %p478 = pneg %p290
        %p479 = pneg %p287
        %p480 = pneg %p311
        %p481 = pneg %p308
        %p482 = pneg %p332
        %p483 = pneg %p329
        %p484 = pneg %p358
        %p485 = pneg %p355
        %s486 = sand.u32 %s345, 1
        %s487 = scalar_lea.sflag [#allocation3], %s486
        %s488 = sand.u32 %s345, 1
        %s489 = smul.addr %s488, 16
        %s490 = scalar_lea.vmem [#allocation2], %s489
        %p491 = scmp.lt.s32.totalorder %s28, 1
        %s492 = scalar_select %p491, %s28, 1
        %s493 = smul.addr %s492, 16
        %s494 = smul.addr %s493, 4
        %s495 = scalar_lea.vmem %s0, %s494
        %p496 = scmp.lt.s32.totalorder %s28, 1
        %s497 = scalar_select %p496, %s28, 1
        %s498 = smul.addr %s497, 16
        %s499 = smul.addr %s498, 4
        %s500 = scalar_lea.vmem %s1, %s499
        %p501 = scmp.lt.s32.totalorder %s28, 1
        %s502 = scalar_select %p501, %s28, 1
        %s503 = smul.addr %s502, 16
        %s504 = smul.addr %s503, 4
        %s505 = scalar_lea.vmem %s2, %s504
        %v507 = vld [vmem:[%s495] sm:$0xf]
        %v508 = vld [vmem:[%s495 + $0x4] sm:$0xf]
        %v509 = vld [vmem:[%s495 + $0x8] sm:$0xf]
        %v510 = vld [vmem:[%s495 + $0xc] sm:$0xf]
        %v511 = vld [vmem:[%s495 + $0x10] sm:$0xf]
        %v512 = vld [vmem:[%s495 + $0x14] sm:$0xf]
        %v513 = vld [vmem:[%s495 + $0x18] sm:$0xf]
        %v514 = vld [vmem:[%s495 + $0x1c] sm:$0xf]
        %v515 = vld [vmem:[%s495 + $0x20] sm:$0xf]
        %v516 = vld [vmem:[%s495 + $0x24] sm:$0xf]
        %v517 = vld [vmem:[%s495 + $0x28] sm:$0xf]
        %v518 = vld [vmem:[%s495 + $0x2c] sm:$0xf]
        %v519 = vld [vmem:[%s495 + $0x30] sm:$0xf]
        %v520 = vld [vmem:[%s495 + $0x34] sm:$0xf]
        %v521 = vld [vmem:[%s495 + $0x38] sm:$0xf]
        %v522 = vld [vmem:[%s495 + $0x3c] sm:$0xf]
        %v523 = vld [vmem:[%s500] sm:$0xf]
        %v524 = vld [vmem:[%s500 + $0x4] sm:$0xf]
        %v525 = vld [vmem:[%s500 + $0x8] sm:$0xf]
        %v526 = vld [vmem:[%s500 + $0xc] sm:$0xf]
        %v527 = vld [vmem:[%s500 + $0x10] sm:$0xf]
        %v528 = vld [vmem:[%s500 + $0x14] sm:$0xf]
        %v529 = vld [vmem:[%s500 + $0x18] sm:$0xf]
        %v530 = vld [vmem:[%s500 + $0x1c] sm:$0xf]
        %v531 = vld [vmem:[%s500 + $0x20] sm:$0xf]
        %v532 = vld [vmem:[%s500 + $0x24] sm:$0xf]
        %v533 = vld [vmem:[%s500 + $0x28] sm:$0xf]
        %v534 = vld [vmem:[%s500 + $0x2c] sm:$0xf]
        %v535 = vld [vmem:[%s500 + $0x30] sm:$0xf]
        %v536 = vld [vmem:[%s500 + $0x34] sm:$0xf]
        %v537 = vld [vmem:[%s500 + $0x38] sm:$0xf]
        %v538 = vld [vmem:[%s500 + $0x3c] sm:$0xf]
        %v539 = vld [vmem:[%s505] sm:$0xf]
        %v540 = vld [vmem:[%s505 + $0x4] sm:$0xf]
        %v541 = vld [vmem:[%s505 + $0x8] sm:$0xf]
        %v542 = vld [vmem:[%s505 + $0xc] sm:$0xf]
        %v543 = vld [vmem:[%s505 + $0x10] sm:$0xf]
        %v544 = vld [vmem:[%s505 + $0x14] sm:$0xf]
        %v545 = vld [vmem:[%s505 + $0x18] sm:$0xf]
        %v546 = vld [vmem:[%s505 + $0x1c] sm:$0xf]
        %v547 = vld [vmem:[%s505 + $0x20] sm:$0xf]
        %v548 = vld [vmem:[%s505 + $0x24] sm:$0xf]
        %v549 = vld [vmem:[%s505 + $0x28] sm:$0xf]
        %v550 = vld [vmem:[%s505 + $0x2c] sm:$0xf]
        %v551 = vld [vmem:[%s505 + $0x30] sm:$0xf]
        %v552 = vld [vmem:[%s505 + $0x34] sm:$0xf]
        %v553 = vld [vmem:[%s505 + $0x38] sm:$0xf]
        %v554 = vld [vmem:[%s505 + $0x3c] sm:$0xf]
        %v555 = vunpack.c.l.bf16 %v539
        %v556 = vunpack.c.l.bf16 %v540
        %v557 = vunpack.c.l.bf16 %v541
        %v558 = vunpack.c.l.bf16 %v542
        %v559 = vunpack.c.l.bf16 %v543
        %v560 = vunpack.c.l.bf16 %v544
        %v561 = vunpack.c.l.bf16 %v545
        %v562 = vunpack.c.l.bf16 %v546
        %v563 = vunpack.c.l.bf16 %v547
        %v564 = vunpack.c.l.bf16 %v548
        %v565 = vunpack.c.l.bf16 %v549
        %v566 = vunpack.c.l.bf16 %v550
        %v567 = vunpack.c.l.bf16 %v551
        %v568 = vunpack.c.l.bf16 %v552
        %v569 = vunpack.c.l.bf16 %v553
        %v570 = vunpack.c.l.bf16 %v554
        %v587 = vunpack.c.l.b16 %v507
        %v588 = vunpack.c.l.b16 %v508
        %v589 = vunpack.c.l.b16 %v509
        %v590 = vunpack.c.l.b16 %v510
        %v591 = vunpack.c.l.b16 %v511
        %v592 = vunpack.c.l.b16 %v512
        %v593 = vunpack.c.l.b16 %v513
        %v594 = vunpack.c.l.b16 %v514
        %v595 = vunpack.c.l.b16 %v515
        %v596 = vunpack.c.l.b16 %v516
        %v597 = vunpack.c.l.b16 %v517
        %v598 = vunpack.c.l.b16 %v518
        %v599 = vunpack.c.l.b16 %v519
        %v600 = vunpack.c.l.b16 %v520
        %v601 = vunpack.c.l.b16 %v521
        %v602 = vunpack.c.l.b16 %v522
        %v603 = vpack.c.b16 %v588, %v587
        %v604 = vpack.c.b16 %v590, %v589
        %v605 = vpack.c.b16 %v592, %v591
        %v606 = vpack.c.b16 %v594, %v593
        %v607 = vpack.c.b16 %v596, %v595
        %v608 = vpack.c.b16 %v598, %v597
        %v609 = vpack.c.b16 %v600, %v599
        %v610 = vpack.c.b16 %v602, %v601
        %v635 = vunpack.c.l.b16 %v523
        %v636 = vunpack.c.l.b16 %v524
        %v637 = vunpack.c.l.b16 %v525
        %v638 = vunpack.c.l.b16 %v526
        %v639 = vunpack.c.l.b16 %v527
        %v640 = vunpack.c.l.b16 %v528
        %v641 = vunpack.c.l.b16 %v529
        %v642 = vunpack.c.l.b16 %v530
        %v643 = vunpack.c.l.b16 %v531
        %v644 = vunpack.c.l.b16 %v532
        %v645 = vunpack.c.l.b16 %v533
        %v646 = vunpack.c.l.b16 %v534
        %v647 = vunpack.c.l.b16 %v535
        %v648 = vunpack.c.l.b16 %v536
        %v649 = vunpack.c.l.b16 %v537
        %v650 = vunpack.c.l.b16 %v538
        %v651 = vpack.c.b16 %v636, %v635
        %v652 = vpack.c.b16 %v638, %v637
        %v653 = vpack.c.b16 %v640, %v639
        %v654 = vpack.c.b16 %v642, %v641
        %v655 = vpack.c.b16 %v644, %v643
        %v656 = vpack.c.b16 %v646, %v645
        %v657 = vpack.c.b16 %v648, %v647
        %v658 = vpack.c.b16 %v650, %v649
        %667 = vmatprep.subr.bf16.mxu0 0
        %668 = vmatpush1.bf16.msra.mxu0 %v651
        %669 = vmatprep.subr.bf16.mxu0 0
        %670 = vmatpush1.bf16.msra.mxu0 %v652
        %671 = vmatprep.subr.bf16.mxu0 0
        %672 = vmatpush1.bf16.msra.mxu0 %v653
        %673 = vmatprep.subr.bf16.mxu0 0
        %674 = vmatpush1.bf16.msra.mxu0 %v654
        %675 = vmatprep.subr.bf16.mxu0 0
        %676 = vmatpush1.bf16.msra.mxu0 %v655
        %677 = vmatprep.subr.bf16.mxu0 0
        %678 = vmatpush1.bf16.msra.mxu0 %v656
        %679 = vmatprep.subr.bf16.mxu0 0
        %680 = vmatpush1.bf16.msra.mxu0 %v657
        %681 = vmatprep.subr.bf16.mxu0 0
        %682 = vmatpush1.bf16.msra.mxu0 %v658
        %683 = vmatprep.subr.bf16.mxu0 0
        %684 = vmatpush1.bf16.msra.mxu0 0
        %685 = vmatprep.subr.bf16.mxu0 0
        %686 = vmatpush1.bf16.msra.mxu0 0
        %687 = vmatprep.subr.bf16.mxu0 0
        %688 = vmatpush1.bf16.msra.mxu0 0
        %689 = vmatprep.subr.bf16.mxu0 0
        %690 = vmatpush1.bf16.msra.mxu0 0
        %691 = vmatprep.subr.bf16.mxu0 0
        %692 = vmatpush1.bf16.msra.mxu0 0
        %693 = vmatprep.subr.bf16.mxu0 0
        %694 = vmatpush1.bf16.msra.mxu0 0
        %695 = vmatprep.subr.bf16.mxu0 0
        %696 = vmatpush1.bf16.msra.mxu0 0
        %697 = vmatprep.subr.bf16.mxu0 0
        %698 = vmatpush1.bf16.msra.mxu0 0
        %699 = vmatprep.mubr.bf16.mxu0 0
        %700 = vmatmul.mubr.bf16.gmra.mrb[0].mxu0 %v603
        %v701 = vpop.f32.mrb[0].mxu0
        %v702 = vadd.f32 0.0, %v701
        %v703 = vpop.f32.mrb[0].mxu0
        %v704 = vpop.f32.mrb[0].mxu0
        %v705 = vadd.f32 0.0, %v704
        %v706 = vpop.f32.mrb[0].mxu0
        %707 = vmatprep.mubr.bf16.mxu0 0
        %708 = vmatmul.mubr.bf16.gmra.mrb[0].mxu0 %v604
        %v709 = vpop.f32.mrb[0].mxu0
        %v710 = vadd.f32 0.0, %v709
        %v711 = vpop.f32.mrb[0].mxu0
        %v712 = vpop.f32.mrb[0].mxu0
        %v713 = vadd.f32 0.0, %v712
        %v714 = vpop.f32.mrb[0].mxu0
        %715 = vmatprep.mubr.bf16.mxu0 0
        %716 = vmatmul.mubr.bf16.gmra.mrb[0].mxu0 %v605
        %v717 = vpop.f32.mrb[0].mxu0
        %v718 = vadd.f32 0.0, %v717
        %v719 = vpop.f32.mrb[0].mxu0
        %v720 = vpop.f32.mrb[0].mxu0
        %v721 = vadd.f32 0.0, %v720
        %v722 = vpop.f32.mrb[0].mxu0
        %723 = vmatprep.mubr.bf16.mxu0 0
        %724 = vmatmul.mubr.bf16.gmra.mrb[0].mxu0 %v606
        %v725 = vpop.f32.mrb[0].mxu0
        %v726 = vadd.f32 0.0, %v725
        %v727 = vpop.f32.mrb[0].mxu0
        %v728 = vpop.f32.mrb[0].mxu0
        %v729 = vadd.f32 0.0, %v728
        %v730 = vpop.f32.mrb[0].mxu0
        %731 = vmatprep.mubr.bf16.mxu0 0
        %732 = vmatmul.mubr.bf16.gmra.mrb[0].mxu0 %v607
        %v733 = vpop.f32.mrb[0].mxu0
        %v734 = vadd.f32 0.0, %v733
        %v735 = vpop.f32.mrb[0].mxu0
        %v736 = vpop.f32.mrb[0].mxu0
        %v737 = vadd.f32 0.0, %v736
        %v738 = vpop.f32.mrb[0].mxu0
        %739 = vmatprep.mubr.bf16.mxu0 0
        %740 = vmatmul.mubr.bf16.gmra.mrb[0].mxu0 %v608
        %v741 = vpop.f32.mrb[0].mxu0
        %v742 = vadd.f32 0.0, %v741
        %v743 = vpop.f32.mrb[0].mxu0
        %v744 = vpop.f32.mrb[0].mxu0
        %v745 = vadd.f32 0.0, %v744
        %v746 = vpop.f32.mrb[0].mxu0
        %747 = vmatprep.mubr.bf16.mxu0 0
        %748 = vmatmul.mubr.bf16.gmra.mrb[0].mxu0 %v609
        %v749 = vpop.f32.mrb[0].mxu0
        %v750 = vadd.f32 0.0, %v749
        %v751 = vpop.f32.mrb[0].mxu0
        %v752 = vpop.f32.mrb[0].mxu0
        %v753 = vadd.f32 0.0, %v752
        %v754 = vpop.f32.mrb[0].mxu0
        %755 = vmatprep.mubr.bf16.mxu0 0
        %756 = vmatmul.mubr.bf16.gmra.mrb[0].mxu0 %v610
        %v757 = vpop.f32.mrb[0].mxu0
        %v758 = vadd.f32 0.0, %v757
        %v759 = vpop.f32.mrb[0].mxu0
        %v760 = vpop.f32.mrb[0].mxu0
        %v761 = vadd.f32 0.0, %v760
        %v762 = vpop.f32.mrb[0].mxu0
        %763 = vdwg.mxu0
        %v764 = vpack.c.bf16 %v705, %v702
        %v765 = vpack.c.bf16 %v713, %v710
        %v766 = vpack.c.bf16 %v721, %v718
        %v767 = vpack.c.bf16 %v729, %v726
        %v768 = vpack.c.bf16 %v737, %v734
        %v769 = vpack.c.bf16 %v745, %v742
        %v770 = vpack.c.bf16 %v753, %v750
        %v771 = vpack.c.bf16 %v761, %v758
        %v772 = vld [vmem:[%s3] sm:$0xf]
        %v773 = vld [vmem:[%s3 + $0x4] sm:$0xf]
        %v774 = vld [vmem:[%s4] sm:$0x1]
        %v776 = vlaneseq
        %v777 = vshrl.u32 %v776, 7
        %v778 = vsub.s32 0, %v777
        %v779 = vrot.slane %v774, %v778
        %v783 = vunpack.c.l.b16 %v772
        %v784 = vunpack.c.l.b16 %v773
        %v785 = vpack.c.b16 %v784, %v783
        %vm787 = vcmask 130048
        %v789 = vsel %vm787, %v764, 0
        %v792 = vsel %vm787, %v765, 0
        %v795 = vsel %vm787, %v766, 0
        %v798 = vsel %vm787, %v767, 0
        %v801 = vsel %vm787, %v768, 0
        %v804 = vsel %vm787, %v769, 0
        %v807 = vsel %vm787, %v770, 0
        %v810 = vsel %vm787, %v771, 0
        %812 = vmatprep.subr.bf16.mxu0 0
        %813 = vmatpush1.bf16.msra.mxu0 %v785
        %814 = vmatprep.subr.bf16.mxu0 0
        %815 = vmatpush1.bf16.msra.mxu0 0
        %816 = vmatprep.subr.bf16.mxu0 0
        %817 = vmatpush1.bf16.msra.mxu0 0
        %818 = vmatprep.subr.bf16.mxu0 0
        %819 = vmatpush1.bf16.msra.mxu0 0
        %820 = vmatprep.subr.bf16.mxu0 0
        %821 = vmatpush1.bf16.msra.mxu0 0
        %822 = vmatprep.subr.bf16.mxu0 0
        %823 = vmatpush1.bf16.msra.mxu0 0
        %824 = vmatprep.subr.bf16.mxu0 0
        %825 = vmatpush1.bf16.msra.mxu0 0
        %826 = vmatprep.subr.bf16.mxu0 0
        %827 = vmatpush1.bf16.msra.mxu0 0
        %828 = vmatprep.subr.bf16.mxu0 0
        %829 = vmatpush1.bf16.msra.mxu0 0
        %830 = vmatprep.subr.bf16.mxu0 0
        %831 = vmatpush1.bf16.msra.mxu0 0
        %832 = vmatprep.subr.bf16.mxu0 0
        %833 = vmatpush1.bf16.msra.mxu0 0
        %834 = vmatprep.subr.bf16.mxu0 0
        %835 = vmatpush1.bf16.msra.mxu0 0
        %836 = vmatprep.subr.bf16.mxu0 0
        %837 = vmatpush1.bf16.msra.mxu0 0
        %838 = vmatprep.subr.bf16.mxu0 0
        %839 = vmatpush1.bf16.msra.mxu0 0
        %840 = vmatprep.subr.bf16.mxu0 0
        %841 = vmatpush1.bf16.msra.mxu0 0
        %842 = vmatprep.subr.bf16.mxu0 0
        %843 = vmatpush1.bf16.msra.mxu0 0
        %844 = vmatprep.mubr.bf16.mxu0 0
        %845 = vmatmul.mubr.bf16.gmra.mrb[0].mxu0 %v789
        %v846 = vpop.f32.mrb[0].mxu0
        %v847 = vadd.f32 %v779, %v846
        %v848 = vpop.f32.mrb[0].mxu0
        %v849 = vpop.f32.mrb[0].mxu0
        %v850 = vadd.f32 %v779, %v849
        %v851 = vpop.f32.mrb[0].mxu0
        %852 = vmatprep.mubr.bf16.mxu0 0
        %853 = vmatmul.mubr.bf16.gmra.mrb[0].mxu0 %v792
        %v854 = vpop.f32.mrb[0].mxu0
        %v855 = vadd.f32 %v779, %v854
        %v856 = vpop.f32.mrb[0].mxu0
        %v857 = vpop.f32.mrb[0].mxu0
        %v858 = vadd.f32 %v779, %v857
        %v859 = vpop.f32.mrb[0].mxu0
        %860 = vmatprep.mubr.bf16.mxu0 0
        %861 = vmatmul.mubr.bf16.gmra.mrb[0].mxu0 %v795
        %v862 = vpop.f32.mrb[0].mxu0
        %v863 = vadd.f32 %v779, %v862
        %v864 = vpop.f32.mrb[0].mxu0
        %v865 = vpop.f32.mrb[0].mxu0
        %v866 = vadd.f32 %v779, %v865
        %v867 = vpop.f32.mrb[0].mxu0
        %868 = vmatprep.mubr.bf16.mxu0 0
        %869 = vmatmul.mubr.bf16.gmra.mrb[0].mxu0 %v798
        %v870 = vpop.f32.mrb[0].mxu0
        %v871 = vadd.f32 %v779, %v870
        %v872 = vpop.f32.mrb[0].mxu0
        %v873 = vpop.f32.mrb[0].mxu0
        %v874 = vadd.f32 %v779, %v873
        %v875 = vpop.f32.mrb[0].mxu0
        %876 = vmatprep.mubr.bf16.mxu0 0
        %877 = vmatmul.mubr.bf16.gmra.mrb[0].mxu0 %v801
        %v878 = vpop.f32.mrb[0].mxu0
        %v879 = vadd.f32 %v779, %v878
        %v880 = vpop.f32.mrb[0].mxu0
        %v881 = vpop.f32.mrb[0].mxu0
        %v882 = vadd.f32 %v779, %v881
        %v883 = vpop.f32.mrb[0].mxu0
        %884 = vmatprep.mubr.bf16.mxu0 0
        %885 = vmatmul.mubr.bf16.gmra.mrb[0].mxu0 %v804
        %v886 = vpop.f32.mrb[0].mxu0
        %v887 = vadd.f32 %v779, %v886
        %v888 = vpop.f32.mrb[0].mxu0
        %v889 = vpop.f32.mrb[0].mxu0
        %v890 = vadd.f32 %v779, %v889
        %v891 = vpop.f32.mrb[0].mxu0
        %892 = vmatprep.mubr.bf16.mxu0 0
        %893 = vmatmul.mubr.bf16.gmra.mrb[0].mxu0 %v807
        %v894 = vpop.f32.mrb[0].mxu0
        %v895 = vadd.f32 %v779, %v894
        %v896 = vpop.f32.mrb[0].mxu0
        %v897 = vpop.f32.mrb[0].mxu0
        %v898 = vadd.f32 %v779, %v897
        %v899 = vpop.f32.mrb[0].mxu0
        %900 = vmatprep.mubr.bf16.mxu0 0
        %901 = vmatmul.mubr.bf16.gmra.mrb[0].mxu0 %v810
        %v902 = vpop.f32.mrb[0].mxu0
        %v903 = vadd.f32 %v779, %v902
        %v904 = vpop.f32.mrb[0].mxu0
        %v905 = vpop.f32.mrb[0].mxu0
        %v906 = vadd.f32 %v779, %v905
        %v907 = vpop.f32.mrb[0].mxu0
        %908 = vdwg.mxu0
        %v909 = vmax.f32 %v847, 0.0
        %v910 = vmax.f32 %v850, 0.0
        %v911 = vmax.f32 %v855, 0.0
        %v912 = vmax.f32 %v858, 0.0
        %v913 = vmax.f32 %v863, 0.0
        %v914 = vmax.f32 %v866, 0.0
        %v915 = vmax.f32 %v871, 0.0
        %v916 = vmax.f32 %v874, 0.0
        %v917 = vmax.f32 %v879, 0.0
        %v918 = vmax.f32 %v882, 0.0
        %v919 = vmax.f32 %v887, 0.0
        %v920 = vmax.f32 %v890, 0.0
        %v921 = vmax.f32 %v895, 0.0
        %v922 = vmax.f32 %v898, 0.0
        %v923 = vmax.f32 %v903, 0.0
        %v924 = vmax.f32 %v906, 0.0
        %v925 = vpack.c.bf16 %v910, %v909
        %v926 = vpack.c.bf16 %v912, %v911
        %v927 = vpack.c.bf16 %v914, %v913
        %v928 = vpack.c.bf16 %v916, %v915
        %v929 = vpack.c.bf16 %v918, %v917
        %v930 = vpack.c.bf16 %v920, %v919
        %v931 = vpack.c.bf16 %v922, %v921
        %v932 = vpack.c.bf16 %v924, %v923
        %v933 = vld [vmem:[%s5] sm:$0xf]
        %v934 = vld [vmem:[%s5 + $0x4] sm:$0xf]
        %v935 = vld [vmem:[%s5 + $0x8] sm:$0xf]
        %v936 = vld [vmem:[%s5 + $0xc] sm:$0xf]
        %v937 = vld [vmem:[%s5 + $0x10] sm:$0xf]
        %v938 = vld [vmem:[%s5 + $0x14] sm:$0xf]
        %v939 = vld [vmem:[%s5 + $0x18] sm:$0xf]
        %v940 = vld [vmem:[%s5 + $0x1c] sm:$0xf]
        %v949 = vunpack.c.l.b16 %v933
        %v950 = vunpack.c.l.b16 %v934
        %v951 = vunpack.c.l.b16 %v935
        %v952 = vunpack.c.l.b16 %v936
        %v953 = vunpack.c.l.b16 %v937
        %v954 = vunpack.c.l.b16 %v938
        %v955 = vunpack.c.l.b16 %v939
        %v956 = vunpack.c.l.b16 %v940
        %v957 = vpack.c.b16 %v950, %v949
        %v958 = vpack.c.b16 %v952, %v951
        %v959 = vpack.c.b16 %v954, %v953
        %v960 = vpack.c.b16 %v956, %v955
        %vm965 = vcmask 523264
        %v967 = vsel %vm965, %v925, 0
        %v970 = vsel %vm965, %v926, 0
        %v973 = vsel %vm965, %v927, 0
        %v976 = vsel %vm965, %v928, 0
        %v979 = vsel %vm965, %v929, 0
        %v982 = vsel %vm965, %v930, 0
        %v985 = vsel %vm965, %v931, 0
        %v988 = vsel %vm965, %v932, 0
        %990 = vmatprep.subr.bf16.mxu0 0
        %991 = vmatpush1.bf16.msra.mxu0 %v957
        %992 = vmatprep.subr.bf16.mxu0 0
        %993 = vmatpush1.bf16.msra.mxu0 %v958
        %994 = vmatprep.subr.bf16.mxu0 0
        %995 = vmatpush1.bf16.msra.mxu0 %v959
        %996 = vmatprep.subr.bf16.mxu0 0
        %997 = vmatpush1.bf16.msra.mxu0 %v960
        %998 = vmatprep.subr.bf16.mxu0 0
        %999 = vmatpush1.bf16.msra.mxu0 0
        %1000 = vmatprep.subr.bf16.mxu0 0
        %1001 = vmatpush1.bf16.msra.mxu0 0
        %1002 = vmatprep.subr.bf16.mxu0 0
        %1003 = vmatpush1.bf16.msra.mxu0 0
        %1004 = vmatprep.subr.bf16.mxu0 0
        %1005 = vmatpush1.bf16.msra.mxu0 0
        %1006 = vmatprep.subr.bf16.mxu0 0
        %1007 = vmatpush1.bf16.msra.mxu0 0
        %1008 = vmatprep.subr.bf16.mxu0 0
        %1009 = vmatpush1.bf16.msra.mxu0 0
        %1010 = vmatprep.subr.bf16.mxu0 0
        %1011 = vmatpush1.bf16.msra.mxu0 0
        %1012 = vmatprep.subr.bf16.mxu0 0
        %1013 = vmatpush1.bf16.msra.mxu0 0
        %1014 = vmatprep.subr.bf16.mxu0 0
        %1015 = vmatpush1.bf16.msra.mxu0 0
        %1016 = vmatprep.subr.bf16.mxu0 0
        %1017 = vmatpush1.bf16.msra.mxu0 0
        %1018 = vmatprep.subr.bf16.mxu0 0
        %1019 = vmatpush1.bf16.msra.mxu0 0
        %1020 = vmatprep.subr.bf16.mxu0 0
        %1021 = vmatpush1.bf16.msra.mxu0 0
        %1022 = vmatprep.mubr.bf16.mxu0 0
        %1023 = vmatmul.mubr.bf16.gmra.mrb[0].mxu0 %v967
        %v1024 = vpop.f32.mrb[0].mxu0
        %v1025 = vadd.f32 0.0, %v1024
        %v1026 = vpop.f32.mrb[0].mxu0
        %v1027 = vpop.f32.mrb[0].mxu0
        %v1028 = vadd.f32 0.0, %v1027
        %v1029 = vpop.f32.mrb[0].mxu0
        %1030 = vmatprep.mubr.bf16.mxu0 0
        %1031 = vmatmul.mubr.bf16.gmra.mrb[0].mxu0 %v970
        %v1032 = vpop.f32.mrb[0].mxu0
        %v1033 = vadd.f32 0.0, %v1032
        %v1034 = vpop.f32.mrb[0].mxu0
        %v1035 = vpop.f32.mrb[0].mxu0
        %v1036 = vadd.f32 0.0, %v1035
        %v1037 = vpop.f32.mrb[0].mxu0
        %1038 = vmatprep.mubr.bf16.mxu0 0
        %1039 = vmatmul.mubr.bf16.gmra.mrb[0].mxu0 %v973
        %v1040 = vpop.f32.mrb[0].mxu0
        %v1041 = vadd.f32 0.0, %v1040
        %v1042 = vpop.f32.mrb[0].mxu0
        %v1043 = vpop.f32.mrb[0].mxu0
        %v1044 = vadd.f32 0.0, %v1043
        %v1045 = vpop.f32.mrb[0].mxu0
        %1046 = vmatprep.mubr.bf16.mxu0 0
        %1047 = vmatmul.mubr.bf16.gmra.mrb[0].mxu0 %v976
        %v1048 = vpop.f32.mrb[0].mxu0
        %v1049 = vadd.f32 0.0, %v1048
        %v1050 = vpop.f32.mrb[0].mxu0
        %v1051 = vpop.f32.mrb[0].mxu0
        %v1052 = vadd.f32 0.0, %v1051
        %v1053 = vpop.f32.mrb[0].mxu0
        %1054 = vmatprep.mubr.bf16.mxu0 0
        %1055 = vmatmul.mubr.bf16.gmra.mrb[0].mxu0 %v979
        %v1056 = vpop.f32.mrb[0].mxu0
        %v1057 = vadd.f32 0.0, %v1056
        %v1058 = vpop.f32.mrb[0].mxu0
        %v1059 = vpop.f32.mrb[0].mxu0
        %v1060 = vadd.f32 0.0, %v1059
        %v1061 = vpop.f32.mrb[0].mxu0
        %1062 = vmatprep.mubr.bf16.mxu0 0
        %1063 = vmatmul.mubr.bf16.gmra.mrb[0].mxu0 %v982
        %v1064 = vpop.f32.mrb[0].mxu0
        %v1065 = vadd.f32 0.0, %v1064
        %v1066 = vpop.f32.mrb[0].mxu0
        %v1067 = vpop.f32.mrb[0].mxu0
        %v1068 = vadd.f32 0.0, %v1067
        %v1069 = vpop.f32.mrb[0].mxu0
        %1070 = vmatprep.mubr.bf16.mxu0 0
        %1071 = vmatmul.mubr.bf16.gmra.mrb[0].mxu0 %v985
        %v1072 = vpop.f32.mrb[0].mxu0
        %v1073 = vadd.f32 0.0, %v1072
        %v1074 = vpop.f32.mrb[0].mxu0
        %v1075 = vpop.f32.mrb[0].mxu0
        %v1076 = vadd.f32 0.0, %v1075
        %v1077 = vpop.f32.mrb[0].mxu0
        %1078 = vmatprep.mubr.bf16.mxu0 0
        %1079 = vmatmul.mubr.bf16.gmra.mrb[0].mxu0 %v988
        %v1080 = vpop.f32.mrb[0].mxu0
        %v1081 = vadd.f32 0.0, %v1080
        %v1082 = vpop.f32.mrb[0].mxu0
        %v1083 = vpop.f32.mrb[0].mxu0
        %v1084 = vadd.f32 0.0, %v1083
        %v1085 = vpop.f32.mrb[0].mxu0
        %1086 = vdwg.mxu0
        %v1087 = vpack.c.bf16 %v1028, %v1025
        %v1088 = vpack.c.bf16 %v1036, %v1033
        %v1089 = vpack.c.bf16 %v1044, %v1041
        %v1090 = vpack.c.bf16 %v1052, %v1049
        %v1091 = vpack.c.bf16 %v1060, %v1057
        %v1092 = vpack.c.bf16 %v1068, %v1065
        %v1093 = vpack.c.bf16 %v1076, %v1073
        %v1094 = vpack.c.bf16 %v1084, %v1081
        %v1095 = vld [vmem:[%s6] sm:$0x1]
        %v1097 = vlaneseq
        %v1098 = vshrl.u32 %v1097, 7
        %v1099 = vsub.s32 0, %v1098
        %v1100 = vrot.slane %v1095, %v1099
        %1102 = vmatprep.subr.bf16.mxu0 0
        %1103 = vmatpush1.bf16.msra.mxu0 %v1087
        %1104 = vmatprep.subr.bf16.mxu0 0
        %1105 = vmatpush1.bf16.msra.mxu0 %v1088
        %1106 = vmatprep.subr.bf16.mxu0 0
        %1107 = vmatpush1.bf16.msra.mxu0 %v1089
        %1108 = vmatprep.subr.bf16.mxu0 0
        %1109 = vmatpush1.bf16.msra.mxu0 %v1090
        %1110 = vmatprep.subr.bf16.mxu0 0
        %1111 = vmatpush1.bf16.msra.mxu0 %v1091
        %1112 = vmatprep.subr.bf16.mxu0 0
        %1113 = vmatpush1.bf16.msra.mxu0 %v1092
        %1114 = vmatprep.subr.bf16.mxu0 0
        %1115 = vmatpush1.bf16.msra.mxu0 %v1093
        %1116 = vmatprep.subr.bf16.mxu0 0
        %1117 = vmatpush1.bf16.msra.mxu0 %v1094
        %1118 = vmatprep.subr.bf16.mxu0 0
        %1119 = vmatpush1.bf16.msra.mxu0 0
        %1120 = vmatprep.subr.bf16.mxu0 0
        %1121 = vmatpush1.bf16.msra.mxu0 0
        %1122 = vmatprep.subr.bf16.mxu0 0
        %1123 = vmatpush1.bf16.msra.mxu0 0
        %1124 = vmatprep.subr.bf16.mxu0 0
        %1125 = vmatpush1.bf16.msra.mxu0 0
        %1126 = vmatprep.subr.bf16.mxu0 0
        %1127 = vmatpush1.bf16.msra.mxu0 0
        %1128 = vmatprep.subr.bf16.mxu0 0
        %1129 = vmatpush1.bf16.msra.mxu0 0
        %1130 = vmatprep.subr.bf16.mxu0 0
        %1131 = vmatpush1.bf16.msra.mxu0 0
        %1132 = vmatprep.subr.bf16.mxu0 0
        %1133 = vmatpush1.bf16.msra.mxu0 0
        %1134 = vmatprep.mubr.bf16.mxu0 0
        %1135 = vmatmul.mubr.bf16.gmra.mrb[0].mxu0 %v603
        %v1136 = vpop.f32.mrb[0].mxu0
        %v1137 = vadd.f32 %v1100, %v1136
        %v1138 = vpop.f32.mrb[0].mxu0
        %v1139 = vpop.f32.mrb[0].mxu0
        %v1140 = vadd.f32 %v1100, %v1139
        %v1141 = vpop.f32.mrb[0].mxu0
        %1142 = vmatprep.mubr.bf16.mxu0 0
        %1143 = vmatmul.mubr.bf16.gmra.mrb[0].mxu0 %v604
        %v1144 = vpop.f32.mrb[0].mxu0
        %v1145 = vadd.f32 %v1100, %v1144
        %v1146 = vpop.f32.mrb[0].mxu0
        %v1147 = vpop.f32.mrb[0].mxu0
        %v1148 = vadd.f32 %v1100, %v1147
        %v1149 = vpop.f32.mrb[0].mxu0
        %1150 = vmatprep.mubr.bf16.mxu0 0
        %1151 = vmatmul.mubr.bf16.gmra.mrb[0].mxu0 %v605
        %v1152 = vpop.f32.mrb[0].mxu0
        %v1153 = vadd.f32 %v1100, %v1152
        %v1154 = vpop.f32.mrb[0].mxu0
        %v1155 = vpop.f32.mrb[0].mxu0
        %v1156 = vadd.f32 %v1100, %v1155
        %v1157 = vpop.f32.mrb[0].mxu0
        %1158 = vmatprep.mubr.bf16.mxu0 0
        %1159 = vmatmul.mubr.bf16.gmra.mrb[0].mxu0 %v606
        %v1160 = vpop.f32.mrb[0].mxu0
        %v1161 = vadd.f32 %v1100, %v1160
        %v1162 = vpop.f32.mrb[0].mxu0
        %v1163 = vpop.f32.mrb[0].mxu0
        %v1164 = vadd.f32 %v1100, %v1163
        %v1165 = vpop.f32.mrb[0].mxu0
        %1166 = vmatprep.mubr.bf16.mxu0 0
        %1167 = vmatmul.mubr.bf16.gmra.mrb[0].mxu0 %v607
        %v1168 = vpop.f32.mrb[0].mxu0
        %v1169 = vadd.f32 %v1100, %v1168
        %v1170 = vpop.f32.mrb[0].mxu0
        %v1171 = vpop.f32.mrb[0].mxu0
        %v1172 = vadd.f32 %v1100, %v1171
        %v1173 = vpop.f32.mrb[0].mxu0
        %1174 = vmatprep.mubr.bf16.mxu0 0
        %1175 = vmatmul.mubr.bf16.gmra.mrb[0].mxu0 %v608
        %v1176 = vpop.f32.mrb[0].mxu0
        %v1177 = vadd.f32 %v1100, %v1176
        %v1178 = vpop.f32.mrb[0].mxu0
        %v1179 = vpop.f32.mrb[0].mxu0
        %v1180 = vadd.f32 %v1100, %v1179
        %v1181 = vpop.f32.mrb[0].mxu0
        %1182 = vmatprep.mubr.bf16.mxu0 0
        %1183 = vmatmul.mubr.bf16.gmra.mrb[0].mxu0 %v609
        %v1184 = vpop.f32.mrb[0].mxu0
        %v1185 = vadd.f32 %v1100, %v1184
        %v1186 = vpop.f32.mrb[0].mxu0
        %v1187 = vpop.f32.mrb[0].mxu0
        %v1188 = vadd.f32 %v1100, %v1187
        %v1189 = vpop.f32.mrb[0].mxu0
        %1190 = vmatprep.mubr.bf16.mxu0 0
        %1191 = vmatmul.mubr.bf16.gmra.mrb[0].mxu0 %v610
        %v1192 = vpop.f32.mrb[0].mxu0
        %v1193 = vadd.f32 %v1100, %v1192
        %v1194 = vpop.f32.mrb[0].mxu0
        %v1195 = vpop.f32.mrb[0].mxu0
        %v1196 = vadd.f32 %v1100, %v1195
        %v1197 = vpop.f32.mrb[0].mxu0
        %1198 = vdwg.mxu0
        %v1199 = vmax.f32 %v1137, 0.0
        %v1200 = vmax.f32 %v1140, 0.0
        %v1201 = vmax.f32 %v1145, 0.0
        %v1202 = vmax.f32 %v1148, 0.0
        %v1203 = vmax.f32 %v1153, 0.0
        %v1204 = vmax.f32 %v1156, 0.0
        %v1205 = vmax.f32 %v1161, 0.0
        %v1206 = vmax.f32 %v1164, 0.0
        %v1207 = vmax.f32 %v1169, 0.0
        %v1208 = vmax.f32 %v1172, 0.0
        %v1209 = vmax.f32 %v1177, 0.0
        %v1210 = vmax.f32 %v1180, 0.0
        %v1211 = vmax.f32 %v1185, 0.0
        %v1212 = vmax.f32 %v1188, 0.0
        %v1213 = vmax.f32 %v1193, 0.0
        %v1214 = vmax.f32 %v1196, 0.0
        %v1215 = vpack.c.bf16 %v1200, %v1199
        %v1216 = vpack.c.bf16 %v1202, %v1201
        %v1217 = vpack.c.bf16 %v1204, %v1203
        %v1218 = vpack.c.bf16 %v1206, %v1205
        %v1219 = vpack.c.bf16 %v1208, %v1207
        %v1220 = vpack.c.bf16 %v1210, %v1209
        %v1221 = vpack.c.bf16 %v1212, %v1211
        %v1222 = vpack.c.bf16 %v1214, %v1213
        %v1223 = vld [vmem:[%s7] sm:$0xf]
        %v1224 = vld [vmem:[%s7 + $0x4] sm:$0xf]
        %v1225 = vld [vmem:[%s7 + $0x8] sm:$0xf]
        %v1226 = vld [vmem:[%s7 + $0xc] sm:$0xf]
        %v1227 = vld [vmem:[%s7 + $0x10] sm:$0xf]
        %v1228 = vld [vmem:[%s7 + $0x14] sm:$0xf]
        %v1229 = vld [vmem:[%s7 + $0x18] sm:$0xf]
        %v1230 = vld [vmem:[%s7 + $0x1c] sm:$0xf]
        %v1231 = vld [vmem:[%s8] sm:$0x1]
        %v1233 = vlaneseq
        %v1234 = vshrl.u32 %v1233, 7
        %v1235 = vsub.s32 0, %v1234
        %v1236 = vrot.slane %v1231, %v1235
        %v1246 = vunpack.c.l.b16 %v1223
        %v1247 = vunpack.c.l.b16 %v1224
        %v1248 = vunpack.c.l.b16 %v1225
        %v1249 = vunpack.c.l.b16 %v1226
        %v1250 = vunpack.c.l.b16 %v1227
        %v1251 = vunpack.c.l.b16 %v1228
        %v1252 = vunpack.c.l.b16 %v1229
        %v1253 = vunpack.c.l.b16 %v1230
        %v1254 = vpack.c.b16 %v1247, %v1246
        %v1255 = vpack.c.b16 %v1249, %v1248
        %v1256 = vpack.c.b16 %v1251, %v1250
        %v1257 = vpack.c.b16 %v1253, %v1252
        %v1263 = vsel %vm965, %v1215, 0
        %v1266 = vsel %vm965, %v1216, 0
        %v1269 = vsel %vm965, %v1217, 0
        %v1272 = vsel %vm965, %v1218, 0
        %v1275 = vsel %vm965, %v1219, 0
        %v1278 = vsel %vm965, %v1220, 0
        %v1281 = vsel %vm965, %v1221, 0
        %v1284 = vsel %vm965, %v1222, 0
        %1286 = vmatprep.subr.bf16.mxu0 0
        %1287 = vmatpush1.bf16.msra.mxu0 %v1254
        %1288 = vmatprep.subr.bf16.mxu0 0
        %1289 = vmatpush1.bf16.msra.mxu0 %v1255
        %1290 = vmatprep.subr.bf16.mxu0 0
        %1291 = vmatpush1.bf16.msra.mxu0 %v1256
        %1292 = vmatprep.subr.bf16.mxu0 0
        %1293 = vmatpush1.bf16.msra.mxu0 %v1257
        %1294 = vmatprep.subr.bf16.mxu0 0
        %1295 = vmatpush1.bf16.msra.mxu0 0
        %1296 = vmatprep.subr.bf16.mxu0 0
        %1297 = vmatpush1.bf16.msra.mxu0 0
        %1298 = vmatprep.subr.bf16.mxu0 0
        %1299 = vmatpush1.bf16.msra.mxu0 0
        %1300 = vmatprep.subr.bf16.mxu0 0
        %1301 = vmatpush1.bf16.msra.mxu0 0
        %1302 = vmatprep.subr.bf16.mxu0 0
        %1303 = vmatpush1.bf16.msra.mxu0 0
        %1304 = vmatprep.subr.bf16.mxu0 0
        %1305 = vmatpush1.bf16.msra.mxu0 0
        %1306 = vmatprep.subr.bf16.mxu0 0
        %1307 = vmatpush1.bf16.msra.mxu0 0
        %1308 = vmatprep.subr.bf16.mxu0 0
        %1309 = vmatpush1.bf16.msra.mxu0 0
        %1310 = vmatprep.subr.bf16.mxu0 0
        %1311 = vmatpush1.bf16.msra.mxu0 0
        %1312 = vmatprep.subr.bf16.mxu0 0
        %1313 = vmatpush1.bf16.msra.mxu0 0
        %1314 = vmatprep.subr.bf16.mxu0 0
        %1315 = vmatpush1.bf16.msra.mxu0 0
        %1316 = vmatprep.subr.bf16.mxu0 0
        %1317 = vmatpush1.bf16.msra.mxu0 0
        %1318 = vmatprep.mubr.bf16.mxu0 0
        %1319 = vmatmul.mubr.bf16.gmra.mrb[0].mxu0 %v1263
        %v1320 = vpop.f32.mrb[0].mxu0
        %v1321 = vadd.f32 %v1236, %v1320
        %v1322 = vpop.f32.mrb[0].mxu0
        %v1323 = vpop.f32.mrb[0].mxu0
        %v1324 = vadd.f32 %v1236, %v1323
        %v1325 = vpop.f32.mrb[0].mxu0
        %1326 = vmatprep.mubr.bf16.mxu0 0
        %1327 = vmatmul.mubr.bf16.gmra.mrb[0].mxu0 %v1266
        %v1328 = vpop.f32.mrb[0].mxu0
        %v1329 = vadd.f32 %v1236, %v1328
        %v1330 = vpop.f32.mrb[0].mxu0
        %v1331 = vpop.f32.mrb[0].mxu0
        %v1332 = vadd.f32 %v1236, %v1331
        %v1333 = vpop.f32.mrb[0].mxu0
        %1334 = vmatprep.mubr.bf16.mxu0 0
        %1335 = vmatmul.mubr.bf16.gmra.mrb[0].mxu0 %v1269
        %v1336 = vpop.f32.mrb[0].mxu0
        %v1337 = vadd.f32 %v1236, %v1336
        %v1338 = vpop.f32.mrb[0].mxu0
        %v1339 = vpop.f32.mrb[0].mxu0
        %v1340 = vadd.f32 %v1236, %v1339
        %v1341 = vpop.f32.mrb[0].mxu0
        %1342 = vmatprep.mubr.bf16.mxu0 0
        %1343 = vmatmul.mubr.bf16.gmra.mrb[0].mxu0 %v1272
        %v1344 = vpop.f32.mrb[0].mxu0
        %v1345 = vadd.f32 %v1236, %v1344
        %v1346 = vpop.f32.mrb[0].mxu0
        %v1347 = vpop.f32.mrb[0].mxu0
        %v1348 = vadd.f32 %v1236, %v1347
        %v1349 = vpop.f32.mrb[0].mxu0
        %1350 = vmatprep.mubr.bf16.mxu0 0
        %1351 = vmatmul.mubr.bf16.gmra.mrb[0].mxu0 %v1275
        %v1352 = vpop.f32.mrb[0].mxu0
        %v1353 = vadd.f32 %v1236, %v1352
        %v1354 = vpop.f32.mrb[0].mxu0
        %v1355 = vpop.f32.mrb[0].mxu0
        %v1356 = vadd.f32 %v1236, %v1355
        %v1357 = vpop.f32.mrb[0].mxu0
        %1358 = vmatprep.mubr.bf16.mxu0 0
        %1359 = vmatmul.mubr.bf16.gmra.mrb[0].mxu0 %v1278
        %v1360 = vpop.f32.mrb[0].mxu0
        %v1361 = vadd.f32 %v1236, %v1360
        %v1362 = vpop.f32.mrb[0].mxu0
        %v1363 = vpop.f32.mrb[0].mxu0
        %v1364 = vadd.f32 %v1236, %v1363
        %v1365 = vpop.f32.mrb[0].mxu0
        %1366 = vmatprep.mubr.bf16.mxu0 0
        %1367 = vmatmul.mubr.bf16.gmra.mrb[0].mxu0 %v1281
        %v1368 = vpop.f32.mrb[0].mxu0
        %v1369 = vadd.f32 %v1236, %v1368
        %v1370 = vpop.f32.mrb[0].mxu0
        %v1371 = vpop.f32.mrb[0].mxu0
        %v1372 = vadd.f32 %v1236, %v1371
        %v1373 = vpop.f32.mrb[0].mxu0
        %1374 = vmatprep.mubr.bf16.mxu0 0
        %1375 = vmatmul.mubr.bf16.gmra.mrb[0].mxu0 %v1284
        %v1376 = vpop.f32.mrb[0].mxu0
        %v1377 = vadd.f32 %v1236, %v1376
        %v1378 = vpop.f32.mrb[0].mxu0
        %v1379 = vpop.f32.mrb[0].mxu0
        %v1380 = vadd.f32 %v1236, %v1379
        %v1381 = vpop.f32.mrb[0].mxu0
        %1382 = vdwg.mxu0
        %v1383 = vmax.f32 %v1321, 0.0
        %v1384 = vmax.f32 %v1324, 0.0
        %v1385 = vmax.f32 %v1329, 0.0
        %v1386 = vmax.f32 %v1332, 0.0
        %v1387 = vmax.f32 %v1337, 0.0
        %v1388 = vmax.f32 %v1340, 0.0
        %v1389 = vmax.f32 %v1345, 0.0
        %v1390 = vmax.f32 %v1348, 0.0
        %v1391 = vmax.f32 %v1353, 0.0
        %v1392 = vmax.f32 %v1356, 0.0
        %v1393 = vmax.f32 %v1361, 0.0
        %v1394 = vmax.f32 %v1364, 0.0
        %v1395 = vmax.f32 %v1369, 0.0
        %v1396 = vmax.f32 %v1372, 0.0
        %v1397 = vmax.f32 %v1377, 0.0
        %v1398 = vmax.f32 %v1380, 0.0
        %v1399 = vld [vmem:[%s9] sm:$0x1]
        %v1401 = vlaneseq
        %v1402 = vshrl.u32 %v1401, 7
        %v1403 = vsub.s32 0, %v1402
        %v1404 = vrot.slane %v1399, %v1403
        %v1406 = vmul.f32 %v1383, %v1404
        %v1407 = vmul.f32 %v1384, %v1404
        %v1408 = vmul.f32 %v1385, %v1404
        %v1409 = vmul.f32 %v1386, %v1404
        %v1410 = vmul.f32 %v1387, %v1404
        %v1411 = vmul.f32 %v1388, %v1404
        %v1412 = vmul.f32 %v1389, %v1404
        %v1413 = vmul.f32 %v1390, %v1404
        %v1414 = vmul.f32 %v1391, %v1404
        %v1415 = vmul.f32 %v1392, %v1404
        %v1416 = vmul.f32 %v1393, %v1404
        %v1417 = vmul.f32 %v1394, %v1404
        %v1418 = vmul.f32 %v1395, %v1404
        %v1419 = vmul.f32 %v1396, %v1404
        %v1420 = vmul.f32 %v1397, %v1404
        %v1421 = vmul.f32 %v1398, %v1404
        %1422 = vadd.xlane.f32.xlu0 %v1406
        %v1423 = vpop.xlane.xlu0 %1422
        %1424 = vadd.xlane.f32.xlu0 %v1407
        %v1425 = vpop.xlane.xlu0 %1424
        %1426 = vadd.xlane.f32.xlu0 %v1408
        %v1427 = vpop.xlane.xlu0 %1426
        %1428 = vadd.xlane.f32.xlu0 %v1409
        %v1429 = vpop.xlane.xlu0 %1428
        %1430 = vadd.xlane.f32.xlu0 %v1410
        %v1431 = vpop.xlane.xlu0 %1430
        %1432 = vadd.xlane.f32.xlu0 %v1411
        %v1433 = vpop.xlane.xlu0 %1432
        %1434 = vadd.xlane.f32.xlu0 %v1412
        %v1435 = vpop.xlane.xlu0 %1434
        %1436 = vadd.xlane.f32.xlu0 %v1413
        %v1437 = vpop.xlane.xlu0 %1436
        %1438 = vadd.xlane.f32.xlu0 %v1414
        %v1439 = vpop.xlane.xlu0 %1438
        %1440 = vadd.xlane.f32.xlu0 %v1415
        %v1441 = vpop.xlane.xlu0 %1440
        %1442 = vadd.xlane.f32.xlu0 %v1416
        %v1443 = vpop.xlane.xlu0 %1442
        %1444 = vadd.xlane.f32.xlu0 %v1417
        %v1445 = vpop.xlane.xlu0 %1444
        %1446 = vadd.xlane.f32.xlu0 %v1418
        %v1447 = vpop.xlane.xlu0 %1446
        %1448 = vadd.xlane.f32.xlu0 %v1419
        %v1449 = vpop.xlane.xlu0 %1448
        %1450 = vadd.xlane.f32.xlu0 %v1420
        %v1451 = vpop.xlane.xlu0 %1450
        %1452 = vadd.xlane.f32.xlu0 %v1421
        %v1453 = vpop.xlane.xlu0 %1452
        %vm1454 = vcmp.gt.f32.partialorder %v555, 0.0
        %vm1455 = vcmp.gt.f32.partialorder %v556, 0.0
        %vm1456 = vcmp.gt.f32.partialorder %v557, 0.0
        %vm1457 = vcmp.gt.f32.partialorder %v558, 0.0
        %vm1458 = vcmp.gt.f32.partialorder %v559, 0.0
        %vm1459 = vcmp.gt.f32.partialorder %v560, 0.0
        %vm1460 = vcmp.gt.f32.partialorder %v561, 0.0
        %vm1461 = vcmp.gt.f32.partialorder %v562, 0.0
        %vm1462 = vcmp.gt.f32.partialorder %v563, 0.0
        %vm1463 = vcmp.gt.f32.partialorder %v564, 0.0
        %vm1464 = vcmp.gt.f32.partialorder %v565, 0.0
        %vm1465 = vcmp.gt.f32.partialorder %v566, 0.0
        %vm1466 = vcmp.gt.f32.partialorder %v567, 0.0
        %vm1467 = vcmp.gt.f32.partialorder %v568, 0.0
        %vm1468 = vcmp.gt.f32.partialorder %v569, 0.0
        %vm1469 = vcmp.gt.f32.partialorder %v570, 0.0
        %v1470 = vsel %vm1454, %v1423, -1e+30
        %v1471 = vsel %vm1455, %v1425, -1e+30
        %v1472 = vsel %vm1456, %v1427, -1e+30
        %v1473 = vsel %vm1457, %v1429, -1e+30
        %v1474 = vsel %vm1458, %v1431, -1e+30
        %v1475 = vsel %vm1459, %v1433, -1e+30
        %v1476 = vsel %vm1460, %v1435, -1e+30
        %v1477 = vsel %vm1461, %v1437, -1e+30
        %v1478 = vsel %vm1462, %v1439, -1e+30
        %v1479 = vsel %vm1463, %v1441, -1e+30
        %v1480 = vsel %vm1464, %v1443, -1e+30
        %v1481 = vsel %vm1465, %v1445, -1e+30
        %v1482 = vsel %vm1466, %v1447, -1e+30
        %v1483 = vsel %vm1467, %v1449, -1e+30
        %v1484 = vsel %vm1468, %v1451, -1e+30
        %v1485 = vsel %vm1469, %v1453, -1e+30
        %v1486 = vsel %vm787, %v1470, -inf
        %v1487 = vsel %vm787, %v1471, -inf
        %v1488 = vsel %vm787, %v1472, -inf
        %v1489 = vsel %vm787, %v1473, -inf
        %v1490 = vsel %vm787, %v1474, -inf
        %v1491 = vmax.f32 %v1486, %v1490
        %v1492 = vsel %vm787, %v1475, -inf
        %v1493 = vmax.f32 %v1487, %v1492
        %v1494 = vsel %vm787, %v1476, -inf
        %v1495 = vmax.f32 %v1488, %v1494
        %v1496 = vsel %vm787, %v1477, -inf
        %v1497 = vmax.f32 %v1489, %v1496
        %v1498 = vsel %vm787, %v1478, -inf
        %v1499 = vmax.f32 %v1491, %v1498
        %v1500 = vsel %vm787, %v1479, -inf
        %v1501 = vmax.f32 %v1493, %v1500
        %v1502 = vsel %vm787, %v1480, -inf
        %v1503 = vmax.f32 %v1495, %v1502
        %v1504 = vsel %vm787, %v1481, -inf
        %v1505 = vmax.f32 %v1497, %v1504
        %v1506 = vsel %vm787, %v1482, -inf
        %v1507 = vmax.f32 %v1499, %v1506
        %v1508 = vsel %vm787, %v1483, -inf
        %v1509 = vmax.f32 %v1501, %v1508
        %v1510 = vsel %vm787, %v1484, -inf
        %v1511 = vmax.f32 %v1503, %v1510
        %v1512 = vsel %vm787, %v1485, -inf
        %v1513 = vmax.f32 %v1505, %v1512
        %v1514 = vmax.f32 %v1507, %v1509
        %v1515 = vmax.f32 %v1511, %v1513
        %v1516 = vmax.f32 %v1514, %v1515
        %v1517 = vrot.slane %v1516, 4
        %v1518 = vmax.f32 %v1516, %v1517
        %v1519 = vrot.slane %v1518, 2
        %v1520 = vmax.f32 %v1518, %v1519
        %v1521 = vrot.slane %v1520, 1
        %v1522 = vmax.f32 %v1520, %v1521
        %v1523 = vmul.f32 %v555, %v1522
        %v1524 = vmul.f32 %v556, %v1522
        %v1525 = vmul.f32 %v557, %v1522
        %v1526 = vmul.f32 %v558, %v1522
        %v1527 = vmul.f32 %v559, %v1522
        %v1528 = vmul.f32 %v560, %v1522
        %v1529 = vmul.f32 %v561, %v1522
        %v1530 = vmul.f32 %v562, %v1522
        %v1531 = vmul.f32 %v563, %v1522
        %v1532 = vmul.f32 %v564, %v1522
        %v1533 = vmul.f32 %v565, %v1522
        %v1534 = vmul.f32 %v566, %v1522
        %v1535 = vmul.f32 %v567, %v1522
        %v1536 = vmul.f32 %v568, %v1522
        %v1537 = vmul.f32 %v569, %v1522
        %v1538 = vmul.f32 %v570, %v1522
        %v1539 = vsel %vm787, %v1523, 0.0
        %1540 = vadd.xlane.f32.xlu0 %v1539
        %v1541 = vpop.xlane.xlu0 %1540
        %v1542 = vsel %vm787, %v1524, 0.0
        %1543 = vadd.xlane.f32.xlu0 %v1542
        %v1544 = vpop.xlane.xlu0 %1543
        %v1545 = vsel %vm787, %v1525, 0.0
        %1546 = vadd.xlane.f32.xlu0 %v1545
        %v1547 = vpop.xlane.xlu0 %1546
        %v1548 = vsel %vm787, %v1526, 0.0
        %1549 = vadd.xlane.f32.xlu0 %v1548
        %v1550 = vpop.xlane.xlu0 %1549
        %v1551 = vsel %vm787, %v1527, 0.0
        %1552 = vadd.xlane.f32.xlu0 %v1551
        %v1553 = vpop.xlane.xlu0 %1552
        %v1554 = vsel %vm787, %v1528, 0.0
        %1555 = vadd.xlane.f32.xlu0 %v1554
        %v1556 = vpop.xlane.xlu0 %1555
        %v1557 = vsel %vm787, %v1529, 0.0
        %1558 = vadd.xlane.f32.xlu0 %v1557
        %v1559 = vpop.xlane.xlu0 %1558
        %v1560 = vsel %vm787, %v1530, 0.0
        %1561 = vadd.xlane.f32.xlu0 %v1560
        %v1562 = vpop.xlane.xlu0 %1561
        %v1563 = vsel %vm787, %v1531, 0.0
        %1564 = vadd.xlane.f32.xlu0 %v1563
        %v1565 = vpop.xlane.xlu0 %1564
        %v1566 = vsel %vm787, %v1532, 0.0
        %1567 = vadd.xlane.f32.xlu0 %v1566
        %v1568 = vpop.xlane.xlu0 %1567
        %v1569 = vsel %vm787, %v1533, 0.0
        %1570 = vadd.xlane.f32.xlu0 %v1569
        %v1571 = vpop.xlane.xlu0 %1570
        %v1572 = vsel %vm787, %v1534, 0.0
        %1573 = vadd.xlane.f32.xlu0 %v1572
        %v1574 = vpop.xlane.xlu0 %1573
        %v1575 = vsel %vm787, %v1535, 0.0
        %1576 = vadd.xlane.f32.xlu0 %v1575
        %v1577 = vpop.xlane.xlu0 %1576
        %v1578 = vsel %vm787, %v1536, 0.0
        %1579 = vadd.xlane.f32.xlu0 %v1578
        %v1580 = vpop.xlane.xlu0 %1579
        %v1581 = vsel %vm787, %v1537, 0.0
        %1582 = vadd.xlane.f32.xlu0 %v1581
        %v1583 = vpop.xlane.xlu0 %1582
        %v1584 = vsel %vm787, %v1538, 0.0
        %1585 = vadd.xlane.f32.xlu0 %v1584
        %v1586 = vpop.xlane.xlu0 %1585
        %v1587 = vsub.f32 %v1423, %v1541
        %v1588 = vsub.f32 %v1425, %v1544
        %v1589 = vsub.f32 %v1427, %v1547
        %v1590 = vsub.f32 %v1429, %v1550
        %v1591 = vsub.f32 %v1431, %v1553
        %v1592 = vsub.f32 %v1433, %v1556
        %v1593 = vsub.f32 %v1435, %v1559
        %v1594 = vsub.f32 %v1437, %v1562
        %v1595 = vsub.f32 %v1439, %v1565
        %v1596 = vsub.f32 %v1441, %v1568
        %v1597 = vsub.f32 %v1443, %v1571
        %v1598 = vsub.f32 %v1445, %v1574
        %v1599 = vsub.f32 %v1447, %v1577
        %v1600 = vsub.f32 %v1449, %v1580
        %v1601 = vsub.f32 %v1451, %v1583
        %v1602 = vsub.f32 %v1453, %v1586
        %v1603 = vmul.f32 %v1587, 1.442695
        %v1604 = vpow.pop %v1603
        %v1605 = vmul.f32 %v1588, 1.442695
        %v1606 = vpow.pop %v1605
        %v1607 = vmul.f32 %v1589, 1.442695
        %v1608 = vpow.pop %v1607
        %v1609 = vmul.f32 %v1590, 1.442695
        %v1610 = vpow.pop %v1609
        %v1611 = vmul.f32 %v1591, 1.442695
        %v1612 = vpow.pop %v1611
        %v1613 = vmul.f32 %v1592, 1.442695
        %v1614 = vpow.pop %v1613
        %v1615 = vmul.f32 %v1593, 1.442695
        %v1616 = vpow.pop %v1615
        %v1617 = vmul.f32 %v1594, 1.442695
        %v1618 = vpow.pop %v1617
        %v1619 = vmul.f32 %v1595, 1.442695
        %v1620 = vpow.pop %v1619
        %v1621 = vmul.f32 %v1596, 1.442695
        %v1622 = vpow.pop %v1621
        %v1623 = vmul.f32 %v1597, 1.442695
        %v1624 = vpow.pop %v1623
        %v1625 = vmul.f32 %v1598, 1.442695
        %v1626 = vpow.pop %v1625
        %v1627 = vmul.f32 %v1599, 1.442695
        %v1628 = vpow.pop %v1627
        %v1629 = vmul.f32 %v1600, 1.442695
        %v1630 = vpow.pop %v1629
        %v1631 = vmul.f32 %v1601, 1.442695
        %v1632 = vpow.pop %v1631
        %v1633 = vmul.f32 %v1602, 1.442695
        %v1634 = vpow.pop %v1633
        %v1635 = vmul.f32 %v555, %v1604
        %v1636 = vmul.f32 %v556, %v1606
        %v1637 = vmul.f32 %v557, %v1608
        %v1638 = vmul.f32 %v558, %v1610
        %v1639 = vmul.f32 %v559, %v1612
        %v1640 = vmul.f32 %v560, %v1614
        %v1641 = vmul.f32 %v561, %v1616
        %v1642 = vmul.f32 %v562, %v1618
        %v1643 = vmul.f32 %v563, %v1620
        %v1644 = vmul.f32 %v564, %v1622
        %v1645 = vmul.f32 %v565, %v1624
        %v1646 = vmul.f32 %v566, %v1626
        %v1647 = vmul.f32 %v567, %v1628
        %v1648 = vmul.f32 %v568, %v1630
        %v1649 = vmul.f32 %v569, %v1632
        %v1650 = vmul.f32 %v570, %v1634
        %v1651 = vsel %vm787, %v1635, 0.0
        %v1652 = vsel %vm787, %v1636, 0.0
        %v1653 = vadd.f32 %v1651, %v1652
        %v1654 = vsel %vm787, %v1637, 0.0
        %v1655 = vadd.f32 %v1653, %v1654
        %v1656 = vsel %vm787, %v1638, 0.0
        %v1657 = vadd.f32 %v1655, %v1656
        %v1658 = vsel %vm787, %v1639, 0.0
        %v1659 = vadd.f32 %v1657, %v1658
        %v1660 = vsel %vm787, %v1640, 0.0
        %v1661 = vadd.f32 %v1659, %v1660
        %v1662 = vsel %vm787, %v1641, 0.0
        %v1663 = vadd.f32 %v1661, %v1662
        %v1664 = vsel %vm787, %v1642, 0.0
        %v1665 = vadd.f32 %v1663, %v1664
        %v1666 = vsel %vm787, %v1643, 0.0
        %v1667 = vadd.f32 %v1665, %v1666
        %v1668 = vsel %vm787, %v1644, 0.0
        %v1669 = vadd.f32 %v1667, %v1668
        %v1670 = vsel %vm787, %v1645, 0.0
        %v1671 = vadd.f32 %v1669, %v1670
        %v1672 = vsel %vm787, %v1646, 0.0
        %v1673 = vadd.f32 %v1671, %v1672
        %v1674 = vsel %vm787, %v1647, 0.0
        %v1675 = vadd.f32 %v1673, %v1674
        %v1676 = vsel %vm787, %v1648, 0.0
        %v1677 = vadd.f32 %v1675, %v1676
        %v1678 = vsel %vm787, %v1649, 0.0
        %v1679 = vadd.f32 %v1677, %v1678
        %v1680 = vsel %vm787, %v1650, 0.0
        %v1681 = vadd.f32 %v1679, %v1680
        %v1682 = vrot.slane %v1681, 4
        %v1683 = vadd.f32 %v1681, %v1682
        %v1684 = vrot.slane %v1683, 2
        %v1685 = vadd.f32 %v1683, %v1684
        %v1686 = vrot.slane %v1685, 1
        %v1687 = vadd.f32 %v1685, %v1686
        %v1688 = vrcp.pop %v1687
        %v1689 = vmul.f32 %v555, %v1688
        %v1690 = vmul.f32 %v556, %v1688
        %v1691 = vmul.f32 %v557, %v1688
        %v1692 = vmul.f32 %v558, %v1688
        %v1693 = vmul.f32 %v559, %v1688
        %v1694 = vmul.f32 %v560, %v1688
        %v1695 = vmul.f32 %v561, %v1688
        %v1696 = vmul.f32 %v562, %v1688
        %v1697 = vmul.f32 %v563, %v1688
        %v1698 = vmul.f32 %v564, %v1688
        %v1699 = vmul.f32 %v565, %v1688
        %v1700 = vmul.f32 %v566, %v1688
        %v1701 = vmul.f32 %v567, %v1688
        %v1702 = vmul.f32 %v568, %v1688
        %v1703 = vmul.f32 %v569, %v1688
        %v1704 = vmul.f32 %v570, %v1688
        %v1705 = vsel %vm787, %v1689, 0.0
        %1706 = vadd.xlane.f32.xlu0 %v1705
        %v1707 = vpop.xlane.xlu0 %1706
        %v1708 = vsel %vm787, %v1690, 0.0
        %1709 = vadd.xlane.f32.xlu0 %v1708
        %v1710 = vpop.xlane.xlu0 %1709
        %v1711 = vsel %vm787, %v1691, 0.0
        %1712 = vadd.xlane.f32.xlu0 %v1711
        %v1713 = vpop.xlane.xlu0 %1712
        %v1714 = vsel %vm787, %v1692, 0.0
        %1715 = vadd.xlane.f32.xlu0 %v1714
        %v1716 = vpop.xlane.xlu0 %1715
        %v1717 = vsel %vm787, %v1693, 0.0
        %1718 = vadd.xlane.f32.xlu0 %v1717
        %v1719 = vpop.xlane.xlu0 %1718
        %v1720 = vsel %vm787, %v1694, 0.0
        %1721 = vadd.xlane.f32.xlu0 %v1720
        %v1722 = vpop.xlane.xlu0 %1721
        %v1723 = vsel %vm787, %v1695, 0.0
        %1724 = vadd.xlane.f32.xlu0 %v1723
        %v1725 = vpop.xlane.xlu0 %1724
        %v1726 = vsel %vm787, %v1696, 0.0
        %1727 = vadd.xlane.f32.xlu0 %v1726
        %v1728 = vpop.xlane.xlu0 %1727
        %v1729 = vsel %vm787, %v1697, 0.0
        %1730 = vadd.xlane.f32.xlu0 %v1729
        %v1731 = vpop.xlane.xlu0 %1730
        %v1732 = vsel %vm787, %v1698, 0.0
        %1733 = vadd.xlane.f32.xlu0 %v1732
        %v1734 = vpop.xlane.xlu0 %1733
        %v1735 = vsel %vm787, %v1699, 0.0
        %1736 = vadd.xlane.f32.xlu0 %v1735
        %v1737 = vpop.xlane.xlu0 %1736
        %v1738 = vsel %vm787, %v1700, 0.0
        %1739 = vadd.xlane.f32.xlu0 %v1738
        %v1740 = vpop.xlane.xlu0 %1739
        %v1741 = vsel %vm787, %v1701, 0.0
        %1742 = vadd.xlane.f32.xlu0 %v1741
        %v1743 = vpop.xlane.xlu0 %1742
        %v1744 = vsel %vm787, %v1702, 0.0
        %1745 = vadd.xlane.f32.xlu0 %v1744
        %v1746 = vpop.xlane.xlu0 %1745
        %v1747 = vsel %vm787, %v1703, 0.0
        %1748 = vadd.xlane.f32.xlu0 %v1747
        %v1749 = vpop.xlane.xlu0 %1748
        %v1750 = vsel %vm787, %v1704, 0.0
        %1751 = vadd.xlane.f32.xlu0 %v1750
        %v1752 = vpop.xlane.xlu0 %1751
        %v1753 = vmul.f32 %v1604, %v1707
        %v1754 = vmul.f32 %v1606, %v1710
        %v1755 = vmul.f32 %v1608, %v1713
        %v1756 = vmul.f32 %v1610, %v1716
        %v1757 = vmul.f32 %v1612, %v1719
        %v1758 = vmul.f32 %v1614, %v1722
        %v1759 = vmul.f32 %v1616, %v1725
        %v1760 = vmul.f32 %v1618, %v1728
        %v1761 = vmul.f32 %v1620, %v1731
        %v1762 = vmul.f32 %v1622, %v1734
        %v1763 = vmul.f32 %v1624, %v1737
        %v1764 = vmul.f32 %v1626, %v1740
        %v1765 = vmul.f32 %v1628, %v1743
        %v1766 = vmul.f32 %v1630, %v1746
        %v1767 = vmul.f32 %v1632, %v1749
        %v1768 = vmul.f32 %v1634, %v1752
        %v1769 = vmul.f32 %v1753, %v1199
        %v1770 = vmul.f32 %v1754, %v1200
        %v1771 = vmul.f32 %v1755, %v1201
        %v1772 = vmul.f32 %v1756, %v1202
        %v1773 = vmul.f32 %v1757, %v1203
        %v1774 = vmul.f32 %v1758, %v1204
        %v1775 = vmul.f32 %v1759, %v1205
        %v1776 = vmul.f32 %v1760, %v1206
        %v1777 = vmul.f32 %v1761, %v1207
        %v1778 = vmul.f32 %v1762, %v1208
        %v1779 = vmul.f32 %v1763, %v1209
        %v1780 = vmul.f32 %v1764, %v1210
        %v1781 = vmul.f32 %v1765, %v1211
        %v1782 = vmul.f32 %v1766, %v1212
        %v1783 = vmul.f32 %v1767, %v1213
        %v1784 = vmul.f32 %v1768, %v1214
        %v1785 = vpack.c.bf16 %v1770, %v1769
        %v1786 = vpack.c.bf16 %v1772, %v1771
        %v1787 = vpack.c.bf16 %v1774, %v1773
        %v1788 = vpack.c.bf16 %v1776, %v1775
        %v1789 = vpack.c.bf16 %v1778, %v1777
        %v1790 = vpack.c.bf16 %v1780, %v1779
        %v1791 = vpack.c.bf16 %v1782, %v1781
        %v1792 = vpack.c.bf16 %v1784, %v1783
        %v1809 = vunpack.c.l.b16 %v539
        %v1810 = vunpack.c.l.b16 %v540
        %v1811 = vunpack.c.l.b16 %v541
        %v1812 = vunpack.c.l.b16 %v542
        %v1813 = vunpack.c.l.b16 %v543
        %v1814 = vunpack.c.l.b16 %v544
        %v1815 = vunpack.c.l.b16 %v545
        %v1816 = vunpack.c.l.b16 %v546
        %v1817 = vunpack.c.l.b16 %v547
        %v1818 = vunpack.c.l.b16 %v548
        %v1819 = vunpack.c.l.b16 %v549
        %v1820 = vunpack.c.l.b16 %v550
        %v1821 = vunpack.c.l.b16 %v551
        %v1822 = vunpack.c.l.b16 %v552
        %v1823 = vunpack.c.l.b16 %v553
        %v1824 = vunpack.c.l.b16 %v554
        %v1825 = vpack.c.b16 %v1810, %v1809
        %v1826 = vpack.c.b16 %v1812, %v1811
        %v1827 = vpack.c.b16 %v1814, %v1813
        %v1828 = vpack.c.b16 %v1816, %v1815
        %v1829 = vpack.c.b16 %v1818, %v1817
        %v1830 = vpack.c.b16 %v1820, %v1819
        %v1831 = vpack.c.b16 %v1822, %v1821
        %v1832 = vpack.c.b16 %v1824, %v1823
        %1841 = vxpose.xlu0.c.b16.start [1/8] %v1825, 128
        %1842 = vxpose.xlu0.c.b16.cont [2/8] %v1826, 128
        %1843 = vxpose.xlu0.c.b16.cont [3/8] %v1827, 128
        %1844 = vxpose.xlu0.c.b16.cont [4/8] %v1828, 128
        %1845 = vxpose.xlu0.c.b16.cont [5/8] %v1829, 128
        %1846 = vxpose.xlu0.c.b16.cont [6/8] %v1830, 128
        %1847 = vxpose.xlu0.c.b16.cont [7/8] %v1831, 128
        %1848 = vxpose.xlu0.c.b16.end [8/8] %v1832, 128
        %v1849 = vpop.trf.xlu0
        %v1850 = vpop.trf.xlu0
        %v1851 = vpop.trf.xlu0
        %v1852 = vpop.trf.xlu0
        %v1853 = vpop.trf.xlu0
        %v1854 = vpop.trf.xlu0
        %v1855 = vpop.trf.xlu0
        %v1856 = vpop.trf.xlu0
        %1857 = vmatprep.subr.bf16.mxu0 0
        %1858 = vmatpush1.bf16.msra.mxu0 %v1785
        %1859 = vmatprep.subr.bf16.mxu0 0
        %1860 = vmatpush1.bf16.msra.mxu0 %v1786
        %1861 = vmatprep.subr.bf16.mxu0 0
        %1862 = vmatpush1.bf16.msra.mxu0 %v1787
        %1863 = vmatprep.subr.bf16.mxu0 0
        %1864 = vmatpush1.bf16.msra.mxu0 %v1788
        %1865 = vmatprep.subr.bf16.mxu0 0
        %1866 = vmatpush1.bf16.msra.mxu0 %v1789
        %1867 = vmatprep.subr.bf16.mxu0 0
        %1868 = vmatpush1.bf16.msra.mxu0 %v1790
        %1869 = vmatprep.subr.bf16.mxu0 0
        %1870 = vmatpush1.bf16.msra.mxu0 %v1791
        %1871 = vmatprep.subr.bf16.mxu0 0
        %1872 = vmatpush1.bf16.msra.mxu0 %v1792
        %1873 = vmatprep.subr.bf16.mxu0 0
        %1874 = vmatpush1.bf16.msra.mxu0 0
        %1875 = vmatprep.subr.bf16.mxu0 0
        %1876 = vmatpush1.bf16.msra.mxu0 0
        %1877 = vmatprep.subr.bf16.mxu0 0
        %1878 = vmatpush1.bf16.msra.mxu0 0
        %1879 = vmatprep.subr.bf16.mxu0 0
        %1880 = vmatpush1.bf16.msra.mxu0 0
        %1881 = vmatprep.subr.bf16.mxu0 0
        %1882 = vmatpush1.bf16.msra.mxu0 0
        %1883 = vmatprep.subr.bf16.mxu0 0
        %1884 = vmatpush1.bf16.msra.mxu0 0
        %1885 = vmatprep.subr.bf16.mxu0 0
        %1886 = vmatpush1.bf16.msra.mxu0 0
        %1887 = vmatprep.subr.bf16.mxu0 0
        %1888 = vmatpush1.bf16.msra.mxu0 0
        %1889 = vmatprep.mubr.bf16.mxu0 0
        %1890 = vmatmul.mubr.bf16.gmra.mrb[0].mxu0 %v1849
        %v1891 = vpop.f32.mrb[0].mxu0
        %v1892 = vadd.f32 0.0, %v1891
        %v1893 = vpop.f32.mrb[0].mxu0
        %v1894 = vpop.f32.mrb[0].mxu0
        %v1895 = vadd.f32 0.0, %v1894
        %v1896 = vpop.f32.mrb[0].mxu0
        %1897 = vdwg.mxu0
        %v1898 = vpack.c.bf16 %v1895, %v1892
        %v1899 = vld [vmem:[%s10] sm:$0xf]
        %v1900 = vld [vmem:[%s10 + $0x4] sm:$0xf]
        %v1901 = vld [vmem:[%s10 + $0x8] sm:$0xf]
        %v1902 = vld [vmem:[%s10 + $0xc] sm:$0xf]
        %v1903 = vld [vmem:[%s10 + $0x10] sm:$0xf]
        %v1904 = vld [vmem:[%s10 + $0x14] sm:$0xf]
        %v1905 = vld [vmem:[%s10 + $0x18] sm:$0xf]
        %v1906 = vld [vmem:[%s10 + $0x1c] sm:$0xf]
        %v1907 = vld [vmem:[%s11] sm:$0x1]
        %v1909 = vlaneseq
        %v1910 = vshrl.u32 %v1909, 7
        %v1911 = vsub.s32 0, %v1910
        %v1912 = vrot.slane %v1907, %v1911
        %v1922 = vunpack.c.l.b16 %v1899
        %v1923 = vunpack.c.l.b16 %v1900
        %v1924 = vunpack.c.l.b16 %v1901
        %v1925 = vunpack.c.l.b16 %v1902
        %v1926 = vunpack.c.l.b16 %v1903
        %v1927 = vunpack.c.l.b16 %v1904
        %v1928 = vunpack.c.l.b16 %v1905
        %v1929 = vunpack.c.l.b16 %v1906
        %v1930 = vpack.c.b16 %v1923, %v1922
        %v1931 = vpack.c.b16 %v1925, %v1924
        %v1932 = vpack.c.b16 %v1927, %v1926
        %v1933 = vpack.c.b16 %v1929, %v1928
        %v1939 = vsel %vm965, %v1898, 0
        %1941 = vmatprep.subr.bf16.mxu0 0
        %1942 = vmatpush1.bf16.msra.mxu0 %v1930
        %1943 = vmatprep.subr.bf16.mxu0 0
        %1944 = vmatpush1.bf16.msra.mxu0 %v1931
        %1945 = vmatprep.subr.bf16.mxu0 0
        %1946 = vmatpush1.bf16.msra.mxu0 %v1932
        %1947 = vmatprep.subr.bf16.mxu0 0
        %1948 = vmatpush1.bf16.msra.mxu0 %v1933
        %1949 = vmatprep.subr.bf16.mxu0 0
        %1950 = vmatpush1.bf16.msra.mxu0 0
        %1951 = vmatprep.subr.bf16.mxu0 0
        %1952 = vmatpush1.bf16.msra.mxu0 0
        %1953 = vmatprep.subr.bf16.mxu0 0
        %1954 = vmatpush1.bf16.msra.mxu0 0
        %1955 = vmatprep.subr.bf16.mxu0 0
        %1956 = vmatpush1.bf16.msra.mxu0 0
        %1957 = vmatprep.subr.bf16.mxu0 0
        %1958 = vmatpush1.bf16.msra.mxu0 0
        %1959 = vmatprep.subr.bf16.mxu0 0
        %1960 = vmatpush1.bf16.msra.mxu0 0
        %1961 = vmatprep.subr.bf16.mxu0 0
        %1962 = vmatpush1.bf16.msra.mxu0 0
        %1963 = vmatprep.subr.bf16.mxu0 0
        %1964 = vmatpush1.bf16.msra.mxu0 0
        %1965 = vmatprep.subr.bf16.mxu0 0
        %1966 = vmatpush1.bf16.msra.mxu0 0
        %1967 = vmatprep.subr.bf16.mxu0 0
        %1968 = vmatpush1.bf16.msra.mxu0 0
        %1969 = vmatprep.subr.bf16.mxu0 0
        %1970 = vmatpush1.bf16.msra.mxu0 0
        %1971 = vmatprep.subr.bf16.mxu0 0
        %1972 = vmatpush1.bf16.msra.mxu0 0
        %1973 = vmatprep.mubr.bf16.mxu0 0
        %1974 = vmatmul.mubr.bf16.gmra.mrb[0].mxu0 %v1939
        %v1975 = vpop.f32.mrb[0].mxu0
        %v1976 = vadd.f32 %v1912, %v1975
        %v1977 = vpop.f32.mrb[0].mxu0
        %v1978 = vpop.f32.mrb[0].mxu0
        %v1979 = vadd.f32 %v1912, %v1978
        %v1980 = vpop.f32.mrb[0].mxu0
        %1981 = vdwg.mxu0
        %v1982 = vmax.f32 %v1976, 0.0
        %v1983 = vmax.f32 %v1979, 0.0
        %v1984 = vpack.c.bf16 %v1983, %v1982
        %v1985 = vld [vmem:[%s12] sm:$0xf]
        %v1986 = vld [vmem:[%s12 + $0x4] sm:$0xf]
        %v1987 = vld [vmem:[%s12 + $0x8] sm:$0xf]
        %v1988 = vld [vmem:[%s12 + $0xc] sm:$0xf]
        %v1989 = vld [vmem:[%s12 + $0x10] sm:$0xf]
        %v1990 = vld [vmem:[%s12 + $0x14] sm:$0xf]
        %v1991 = vld [vmem:[%s12 + $0x18] sm:$0xf]
        %v1992 = vld [vmem:[%s12 + $0x1c] sm:$0xf]
        %v1993 = vld [vmem:[%s12 + $0x20] sm:$0xf]
        %v1994 = vld [vmem:[%s12 + $0x24] sm:$0xf]
        %v1995 = vld [vmem:[%s12 + $0x28] sm:$0xf]
        %v1996 = vld [vmem:[%s12 + $0x2c] sm:$0xf]
        %v1997 = vld [vmem:[%s12 + $0x30] sm:$0xf]
        %v1998 = vld [vmem:[%s12 + $0x34] sm:$0xf]
        %v1999 = vld [vmem:[%s12 + $0x38] sm:$0xf]
        %v2000 = vld [vmem:[%s12 + $0x3c] sm:$0xf]
        %v2001 = vld [vmem:[%s13] sm:$0x1]
        %v2003 = vlaneseq
        %v2004 = vshrl.u32 %v2003, 7
        %v2005 = vsub.s32 0, %v2004
        %v2006 = vrot.slane %v2001, %v2005
        %v2024 = vunpack.c.l.b16 %v1985
        %v2025 = vunpack.c.l.b16 %v1986
        %v2026 = vunpack.c.l.b16 %v1987
        %v2027 = vunpack.c.l.b16 %v1988
        %v2028 = vunpack.c.l.b16 %v1989
        %v2029 = vunpack.c.l.b16 %v1990
        %v2030 = vunpack.c.l.b16 %v1991
        %v2031 = vunpack.c.l.b16 %v1992
        %v2032 = vunpack.c.l.b16 %v1993
        %v2033 = vunpack.c.l.b16 %v1994
        %v2034 = vunpack.c.l.b16 %v1995
        %v2035 = vunpack.c.l.b16 %v1996
        %v2036 = vunpack.c.l.b16 %v1997
        %v2037 = vunpack.c.l.b16 %v1998
        %v2038 = vunpack.c.l.b16 %v1999
        %v2039 = vunpack.c.l.b16 %v2000
        %v2040 = vpack.c.b16 %v2025, %v2024
        %v2041 = vpack.c.b16 %v2027, %v2026
        %v2042 = vpack.c.b16 %v2029, %v2028
        %v2043 = vpack.c.b16 %v2031, %v2030
        %v2044 = vpack.c.b16 %v2033, %v2032
        %v2045 = vpack.c.b16 %v2035, %v2034
        %v2046 = vpack.c.b16 %v2037, %v2036
        %v2047 = vpack.c.b16 %v2039, %v2038
        %2056 = vmatprep.subr.bf16.mxu0 0
        %2057 = vmatpush1.bf16.msra.mxu0 %v2040
        %2058 = vmatprep.subr.bf16.mxu0 0
        %2059 = vmatpush1.bf16.msra.mxu0 %v2041
        %2060 = vmatprep.subr.bf16.mxu0 0
        %2061 = vmatpush1.bf16.msra.mxu0 %v2042
        %2062 = vmatprep.subr.bf16.mxu0 0
        %2063 = vmatpush1.bf16.msra.mxu0 %v2043
        %2064 = vmatprep.subr.bf16.mxu0 0
        %2065 = vmatpush1.bf16.msra.mxu0 %v2044
        %2066 = vmatprep.subr.bf16.mxu0 0
        %2067 = vmatpush1.bf16.msra.mxu0 %v2045
        %2068 = vmatprep.subr.bf16.mxu0 0
        %2069 = vmatpush1.bf16.msra.mxu0 %v2046
        %2070 = vmatprep.subr.bf16.mxu0 0
        %2071 = vmatpush1.bf16.msra.mxu0 %v2047
        %2072 = vmatprep.subr.bf16.mxu0 0
        %2073 = vmatpush1.bf16.msra.mxu0 0
        %2074 = vmatprep.subr.bf16.mxu0 0
        %2075 = vmatpush1.bf16.msra.mxu0 0
        %2076 = vmatprep.subr.bf16.mxu0 0
        %2077 = vmatpush1.bf16.msra.mxu0 0
        %2078 = vmatprep.subr.bf16.mxu0 0
        %2079 = vmatpush1.bf16.msra.mxu0 0
        %2080 = vmatprep.subr.bf16.mxu0 0
        %2081 = vmatpush1.bf16.msra.mxu0 0
        %2082 = vmatprep.subr.bf16.mxu0 0
        %2083 = vmatpush1.bf16.msra.mxu0 0
        %2084 = vmatprep.subr.bf16.mxu0 0
        %2085 = vmatpush1.bf16.msra.mxu0 0
        %2086 = vmatprep.subr.bf16.mxu0 0
        %2087 = vmatpush1.bf16.msra.mxu0 0
        %2088 = vmatprep.mubr.bf16.mxu0 0
        %2089 = vmatmul.mubr.bf16.gmra.mrb[0].mxu0 %v1984
        %v2090 = vpop.f32.mrb[0].mxu0
        %v2091 = vadd.f32 %v2006, %v2090
        %v2092 = vpop.f32.mrb[0].mxu0
        %v2093 = vpop.f32.mrb[0].mxu0
        %v2094 = vadd.f32 %v2006, %v2093
        %v2095 = vpop.f32.mrb[0].mxu0
        %2096 = vdwg.mxu0
        %2097 = vst [vmem:[%s490] sm:$0xff] %v2091
        %2098 = vst [vmem:[%s490 + $0x8] sm:$0xff] %v2094
        %s2099 = sand.u32 %s345, 1
        %s2100 = scalar_lea.sflag [#allocation3], %s2099
        %s2101 = sand.u32 %s345, 1
        %s2102 = smul.addr %s2101, 16
        %s2103 = scalar_lea.vmem [#allocation2], %s2102
        // Predicated region
        $region77: #{tpu_custom_call.1} parent=75 // pred_check
          %p2104 = pneg %p355
        $region78: #{tpu_custom_call.1} parent=75 // pred_check_branch
          %2106 = sbr.rel (%p2104) target = $region80
        $region79: #{tpu_custom_call.1} parent=75 // pred_region
          %s2108 = ssub.s32 256, 256
          %2109 = vsyncadd %s2100, %s2108
          %s2110 = smul.addr %s28, 2
          %s2111 = smul.addr %s2110, 128
          %s2112 = scalar_lea.hbm %s14, %s2111
          %s2113 = sshll.u32 %s2103, 4
          %s2114 = int_to_ptr.vmem [resolvable:$true] %s2113
          %2119 = dma.vmem_to_hbm [thread:$0]  %s2114, 256, %s2112, %s2100, 128, 128, 8
        $region80: #{tpu_custom_call.1} parent=75 // pred_fallthru
          _
      $region76: #{tpu_custom_call.1} parent=5 // pred_fallthru
        _
      %p2120 = scmp.le.s32.totalorder 2, %s23
      // Predicated region
      $region81: #{tpu_custom_call.1} parent=5 // pred_check
        %p2121 = pneg %p2120
      $region82: #{tpu_custom_call.1} parent=5 // pred_check_branch
        %2123 = sbr.rel (%p2121) target = $region84
      $region83: #{tpu_custom_call.1} parent=5 // pred_region
        %s2124 = ssub.s32 %s23, 2
        // Predicated region
        $region85: #{tpu_custom_call.1} parent=83 // pred_check
          %p2125 = pneg %p361
        $region86: #{tpu_custom_call.1} parent=83 // pred_check_branch
          %2127 = sbr.rel (%p2125) target = $region88
        $region87: #{tpu_custom_call.1} parent=83 // pred_region
          %s2128 = sand.u32 %s346, 1
          %s2129 = scalar_lea.sflag [#allocation3], %s2128
          %s2130 = sand.u32 %s346, 1
          %s2131 = smul.addr %s2130, 16
          %s2132 = scalar_lea.vmem [#allocation2], %s2131
          %2133 = dma.done %s2129, 256
        $region88: #{tpu_custom_call.1} parent=83 // pred_fallthru
          _
      $region84: #{tpu_custom_call.1} parent=5 // pred_fallthru
        _
    $region6: #{tpu_custom_call.1} parent=1 // loop_footer
      %s27 = sadd.s32 1, %s23
    $region7: #{tpu_custom_call.1} parent=1 // loop_footer_branch
      %22 = sbr.rel target = $region3
    $region8: #{tpu_custom_call.1} parent=1 // loop_exit
      _
    %2134 = vsyncpa [#allocation3], 1
    %s2135 = scalar_lea.sflag [#allocation3], 1
    %2136 = vsyncpa %s2135, 1

</llo_original>
